<compile_context>
chip_gen: v6e
topology: v6e:2x2x1
jax: 0.10.0
libtpu: 0.0.40
codegen_flags: <defaults>
</compile_context>

<pallas_src>
import math

import jax
import jax.numpy as jnp
from jax.experimental import pallas as pl
from jax.experimental.pallas import tpu as pltpu

KH = KW = 3  # kernel_size = 3, stride = 1, pad = (3 - 1) // 2 = 1 ("same")


def _depthwise_relu_multi(xf, dw, dwb, proj_ids, W, mask_l, mask_r):
    """3x3 'same' depthwise conv + bias + ReLU for several projections sharing
    one input block, reusing the 9 shifted tap planes.

    xf      : (TB, H, W, C) taps in the compute dtype (f32 or bf16)
    dw      : (3, KH, KW, C) depthwise weights (same dtype as xf)
    dwb     : (3, C) f32 depthwise biases
    mask_*  : (1, 1, W, C) 0/1 planes (same dtype as xf) for the w-1 / w+1 taps
    returns : list of (TB, H, W, C) f32 activations, one per proj_id
    """
    zrow = jnp.zeros_like(xf[:, :1])
    # H-shifted planes with zero rows at the image boundary: rows[kh] = x[h+kh-1]
    rows = (
        jnp.concatenate([zrow, xf[:, :-1]], axis=1),   # kh = 0 -> x[h-1]
        xf,                                            # kh = 1 -> x[h]
        jnp.concatenate([xf[:, 1:], zrow], axis=1),    # kh = 2 -> x[h+1]
    )
    accs = [None] * len(proj_ids)
    for kh in range(KH):
        p = rows[kh]
        # W-shifted taps via sublane rolls (XLU slot) + 0/1 edge masks (VPU mul).
        taps = (
            pltpu.roll(p, shift=1, axis=2) * mask_l,       # kw=0 -> x[w-1]
            p,                                             # kw=1 -> x[w]
            pltpu.roll(p, shift=W - 1, axis=2) * mask_r,   # kw=2 -> x[w+1]
        )
        for kw in range(KW):
            t = taps[kw]
            for j, pi in enumerate(proj_ids):
                contrib = t * dw[pi, kh, kw]
                if accs[j] is None:
                    accs[j] = contrib.astype(jnp.float32)  # init with first tap
                else:
                    accs[j] = accs[j] + contrib            # promotes to f32
    # bias added once, fused with the ReLU
    return [jnp.maximum(accs[j] + dwb[pi], 0.0) for j, pi in enumerate(proj_ids)]


def _make_fused_kernel(TB, H, W, C, D, shared, mm_dtype, cdt):
    """Fused q/k/v SepConv2d kernel over a TB-batched window block.
    `shared` means attn_kv is None so k/v reuse the same input tile as q.
    D = inner_dim = heads * dim_head."""
    N = TB * H * W
    direct_store = (D % 128 == 0)  # lane-aligned per-projection stores

    def kernel(*refs):
        if shared:
            x_ref, dw_ref, dwb_ref, pw_ref, pwb_ref, out_ref = refs
        else:
            x_ref, kv_ref, dw_ref, dwb_ref, pw_ref, pwb_ref, out_ref = refs

        dw = dw_ref[...]      # (3, KH, KW, C), pre-cast to cdt in the wrapper
        dwb = dwb_ref[...]    # (3, C) f32
        pwb = pwb_ref[...]    # (1, 3*D) f32

        lane_w = jax.lax.broadcasted_iota(jnp.int32, (1, 1, W, C), 2)
        mask_l = (lane_w > 0).astype(cdt)        # valid lanes for the w-1 tap
        mask_r = (lane_w < (W - 1)).astype(cdt)  # valid lanes for the w+1 tap

        xf = x_ref[...].astype(cdt)              # (TB, H, W, C)
        if shared:
            accs = _depthwise_relu_multi(xf, dw, dwb, (0, 1, 2), W, mask_l, mask_r)
        else:
            kvf = kv_ref[...].astype(cdt)
            accs = _depthwise_relu_multi(xf, dw, dwb, (0,), W, mask_l, mask_r)
            accs += _depthwise_relu_multi(kvf, dw, dwb, (1, 2), W, mask_l, mask_r)

        # pointwise 1x1 convs == matmuls over channels (MXU), one per projection.
        outs = []
        for pi in range(3):
            a = accs[pi].reshape(N, C).astype(mm_dtype)
            y = jnp.dot(a, pw_ref[pi], preferred_element_type=jnp.float32)  # (N, D)
            if direct_store:
                y = y + pwb[:, pi * D:(pi + 1) * D]
                out_ref[:, :, pi * D:(pi + 1) * D] = (
                    y.reshape(TB, H * W, D).astype(out_ref.dtype))
            else:
                outs.append(y)
        if not direct_store:
            # single lane-dense store when 3*D is small / not 128-aligned
            y = jnp.concatenate(outs, axis=-1) + pwb   # (N, 3*D)
            out_ref[...] = y.reshape(TB, H * W, 3 * D).astype(out_ref.dtype)

    return kernel


def conv_projection_forward(x, params, heads, attn_kv=None, matmul_dtype=None):
    """x: (b, n, c) tokens with n = l*l.  Returns (q, k, v), each (b, heads, n, d)."""
    b, n, c = x.shape
    l = int(math.isqrt(n))
    assert l * l == n, "token count must be a perfect square"
    shared = attn_kv is None

    inner = params["q"]["pw"].shape[1]
    d = inner // heads
    assert heads * d == inner

    # compute dtypes: bf16 taps / MXU operands for bf16 inputs (v6e/v7x bf16
    # VALU), f32 otherwise.  matmul_dtype can force bf16 matmuls on f32 inputs.
    cdt = jnp.bfloat16 if x.dtype == jnp.bfloat16 else jnp.float32
    mm_dtype = matmul_dtype if matmul_dtype is not None else cdt

    # Stack per-projection weights, pre-cast to their in-kernel compute dtypes.
    order = ("q", "k", "v")
    dw_all = jnp.stack([params[k]["dw"] for k in order]).astype(cdt)       # (3,KH,KW,C)
    dwb_all = jnp.stack([params[k]["dwb"] for k in order]).astype(jnp.float32)  # (3,C)
    pw_all = jnp.stack([params[k]["pw"] for k in order]).astype(mm_dtype)  # (3,C,inner)
    pwb_cat = jnp.concatenate([params[k]["pwb"] for k in order]
                              ).reshape(1, 3 * inner).astype(jnp.float32)

    # 'b (l w) c -> b l w c' (channels-last so C sits on the 128-lane axis)
    x_img = x.reshape(b, l, l, c)
    operands = [x_img]
    if not shared:
        operands.append(attn_kv.reshape(b, l, l, c))
    n_img = len(operands)

    # ---------------- tile sizing (TB windows per grid step) ----------------
    in_itemsize = jnp.dtype(x.dtype).itemsize
    cdt_itemsize = jnp.dtype(cdt).itemsize
    weight_bytes = (dw_all.size * dw_all.dtype.itemsize + dwb_all.size * 4
                    + pw_all.size * pw_all.dtype.itemsize + pwb_cat.size * 4)

    def vmem_bytes(tb_):
        blk_in = tb_ * n * c
        blk_out = tb_ * n * 3 * inner
        io = 2 * (n_img * blk_in * in_itemsize + blk_out * in_itemsize)  # dbl-buffered
        work = blk_in * (6 * cdt_itemsize + 3 * 4) + blk_out * 4         # taps+accs+mm
        return io + work + 2 * weight_bytes

    MXU_ROWS = 256  # fill MXU M dim on v6e/v7x (also >= v5e's 128)
    tb = max(1, min(b, -(-MXU_ROWS // n)))
    if b > 1:
        tb = min(tb, -(-b // 2))  # keep >= 2 grid steps so v7x megacore can shard
    budget = 24 << 20             # conservative; fits v5e/v6e/v7x
    while tb > 1 and vmem_bytes(tb) > budget:
        tb -= 1
    vmem_limit = int(min(64 << 20, max(32 << 20, 2 * vmem_bytes(tb))))

    b_pad = pl.cdiv(b, tb) * tb
    if b_pad != b:  # zero-pad batch to a multiple of TB (padded rows sliced off)
        padw = [(0, b_pad - b), (0, 0), (0, 0), (0, 0)]
        operands = [jnp.pad(o, padw) for o in operands]
    grid = (b_pad // tb,)

    kernel = _make_fused_kernel(tb, l, l, c, inner, shared, mm_dtype, cdt)

    flops = b_pad * (3 * n * c * 2 * KH * KW + 3 * 2 * n * c * inner)
    bytes_accessed = (n_img * b_pad * n * c * in_itemsize
                      + weight_bytes
                      + b_pad * n * 3 * inner * in_itemsize)
    cost = pl.CostEstimate(flops=int(flops), transcendentals=0,
                           bytes_accessed=int(bytes_accessed))

    img_spec = pl.BlockSpec((tb, l, l, c), lambda bi: (bi, 0, 0, 0))
    in_specs = [img_spec] * n_img + [
        pl.BlockSpec((3, KH, KW, c), lambda bi: (0, 0, 0, 0)),
        pl.BlockSpec((3, c), lambda bi: (0, 0)),
        pl.BlockSpec((3, c, inner), lambda bi: (0, 0, 0)),
        pl.BlockSpec((1, 3 * inner), lambda bi: (0, 0)),
    ]

    fused = pl.pallas_call(
        kernel,
        out_shape=jax.ShapeDtypeStruct((b_pad, n, 3 * inner), x.dtype),
        grid=grid,
        in_specs=in_specs,
        out_specs=pl.BlockSpec((tb, n, 3 * inner), lambda bi: (bi, 0, 0)),
        compiler_params=pltpu.CompilerParams(
            dimension_semantics=("parallel",),
            vmem_limit_bytes=vmem_limit),
        cost_estimate=cost,
    )(*operands, dw_all, dwb_all, pw_all, pwb_cat)

    # Single-pass split + head rearrangement to the module's (b, heads, n, d)
    # return contract.  A fused downstream attention kernel should consume
    # `fused` (b, n, 3*inner) directly and skip this HBM round-trip entirely.
    qkv = fused[:b].reshape(b, n, 3, heads, d).transpose(2, 0, 3, 1, 4)
    return qkv[0], qkv[1], qkv[2]


# ---------------- pure-JAX reference (for correctness check) ----------------
def sepconv2d_ref(x_nhwc, dw, dwb, pw, pwb):
    B, H, W, C = x_nhwc.shape
    dw_oihw = dw.transpose(2, 0, 1)[:, None, :, :]  # (C, 1, KH, KW)
    y = jax.lax.conv_general_dilated(
        x_nhwc, dw_oihw, window_strides=(1, 1), padding="SAME",
        dimension_numbers=("NHWC", "OIHW", "NHWC"),
        feature_group_count=C) + dwb
    y = jnp.maximum(y, 0.0)
    return jnp.einsum("bhwc,cd->bhwd", y, pw) + pwb


def conv_projection_ref(x, params, heads, attn_kv=None):
    b, n, c = x.shape
    l = int(math.isqrt(n))
    attn_kv = x if attn_kv is None else attn_kv
    x_img = x.reshape(b, l, l, c)
    kv_img = attn_kv.reshape(b, l, l, c)

    def proj(inp, p):
        y = sepconv2d_ref(inp, p["dw"], p["dwb"], p["pw"], p["pwb"])
        d = y.shape[-1] // heads
        return y.reshape(b, l * l, heads, d).transpose(0, 2, 1, 3)

    return (proj(x_img, params["q"]),
            proj(kv_img, params["k"]),
            proj(kv_img, params["v"]))


def make_params(key, dim, inner_dim):
    def one(k):
        k1, k2, k3, k4 = jax.random.split(k, 4)
        return {
            # depthwise Conv2d(dim, dim, 3, groups=dim): torch weight (dim,1,3,3)
            # stored here as (KH, KW, C)
            "dw": jax.random.normal(k1, (KH, KW, dim), jnp.float32) * 0.1,
            "dwb": jax.random.normal(k2, (dim,), jnp.float32) * 0.1,
            # pointwise Conv2d(dim, inner_dim, 1): torch weight (inner_dim,dim,1,1)
            # stored here as (C, inner_dim)
            "pw": jax.random.normal(k3, (dim, inner_dim), jnp.float32) * 0.1,
            "pwb": jax.random.normal(k4, (inner_dim,), jnp.float32) * 0.1,
        }
    kq, kk, kv = jax.random.split(key, 3)
    return {"q": one(kq), "k": one(kk), "v": one(kv)}


if __name__ == "__main__":
    # small shapes: batch=2, n=64 tokens (8x8 spatial), dim=32, heads=2, dim_head=16
    batch, dim, heads, dim_head = 2, 32, 2, 16
    l = w = 8
    n = l * w
    inner_dim = heads * dim_head

    key = jax.random.PRNGKey(0)
    kx, kkv, kp, kx3 = jax.random.split(key, 4)
    x = jax.random.normal(kx, (batch, n, dim), jnp.float32)
    attn_kv = jax.random.normal(kkv, (batch, n, dim), jnp.float32)
    params = make_params(kp, dim, inner_dim)

    # self-attention path (attn_kv is None): all three projections from one read
    q, k, v = conv_projection_forward(x, params, heads)
    q, k, v = jax.block_until_ready((q, k, v))
    qr, kr, vr = conv_projection_ref(x, params, heads)
    assert q.shape == (batch, heads, n, dim_head)
    assert k.shape == (batch, heads, n, dim_head)
    assert v.shape == (batch, heads, n, dim_head)
    for a, b_ in ((q, qr), (k, kr), (v, vr)):
        assert jnp.allclose(a, b_, atol=1e-4, rtol=1e-4)

    # cross-attention path (separate attn_kv): q from x, k/v share the kv tile
    q2, k2, v2 = conv_projection_forward(x, params, heads, attn_kv=attn_kv)
    q2, k2, v2 = jax.block_until_ready((q2, k2, v2))
    qr2, kr2, vr2 = conv_projection_ref(x, params, heads, attn_kv=attn_kv)
    for a, b_ in ((q2, qr2), (k2, kr2), (v2, vr2)):
        assert jnp.allclose(a, b_, atol=1e-4, rtol=1e-4)

    # odd batch: exercises TB > 1 batching plus the zero-pad / slice-off path
    x3 = jax.random.normal(kx3, (3, n, dim), jnp.float32)
    q3, k3, v3 = conv_projection_forward(x3, params, heads)
    q3, k3, v3 = jax.block_until_ready((q3, k3, v3))
    qr3, kr3, vr3 = conv_projection_ref(x3, params, heads)
    for a, b_ in ((q3, qr3), (k3, kr3), (v3, vr3)):
        assert jnp.allclose(a, b_, atol=1e-4, rtol=1e-4)

    print("KERNEL_OK")
</pallas_src>

<mosaic_0001>
module attributes {stable_mosaic.version = 11 : i64} {
  func.func @kernel(%arg0: i32, %arg1: memref<1x8x8x32xf32, #tpu.memory_space<vmem>>, %arg2: memref<3x3x3x32xf32, #tpu.memory_space<vmem>>, %arg3: memref<3x32xf32, #tpu.memory_space<vmem>>, %arg4: memref<3x32x32xf32, #tpu.memory_space<vmem>>, %arg5: memref<1x96xf32, #tpu.memory_space<vmem>>, %arg6: memref<1x64x96xf32, #tpu.memory_space<vmem>>) attributes {dimension_semantics = [#tpu.dimension_semantics<parallel>], iteration_bounds = array<i64: 2>, scalar_prefetch = 0 : i64, scratch_operands = 0 : i64, tpu.core_type = #tpu.core_type<tc>, window_params = [{transform_indices = @transform_0, window_bounds = array<i64: 1, 8, 8, 32>}, {pipeline_mode = #tpu.pipeline_mode<synchronous>, transform_indices = @transform_1, window_bounds = array<i64: 3, 3, 3, 32>}, {pipeline_mode = #tpu.pipeline_mode<synchronous>, transform_indices = @transform_2, window_bounds = array<i64: 3, 32>}, {pipeline_mode = #tpu.pipeline_mode<synchronous>, transform_indices = @transform_3, window_bounds = array<i64: 3, 32, 32>}, {pipeline_mode = #tpu.pipeline_mode<synchronous>, transform_indices = @transform_4, window_bounds = array<i64: 1, 96>}, {transform_indices = @transform_5, window_bounds = array<i64: 1, 64, 96>}]} {
    %c0 = arith.constant 0 : index
    %c0_0 = arith.constant 0 : index
    %c0_1 = arith.constant 0 : index
    %c0_2 = arith.constant 0 : index
    %0 = vector.load %arg2[%c0, %c0_0, %c0_1, %c0_2] : memref<3x3x3x32xf32, #tpu.memory_space<vmem>>, vector<3x3x3x32xf32>
    %c0_3 = arith.constant 0 : index
    %c0_4 = arith.constant 0 : index
    %1 = vector.load %arg3[%c0_3, %c0_4] : memref<3x32xf32, #tpu.memory_space<vmem>>, vector<3x32xf32>
    %c0_5 = arith.constant 0 : index
    %c0_6 = arith.constant 0 : index
    %2 = vector.load %arg5[%c0_5, %c0_6] : memref<1x96xf32, #tpu.memory_space<vmem>>, vector<1x96xf32>
    %3 = tpu.iota {dimensions = array<i32: 2>} : vector<1x1x8x32xi32>
    %c0_i32 = arith.constant 0 : i32
    %4 = vector.broadcast %c0_i32 : i32 to vector<1x1x8x32xi32>
    %5 = arith.cmpi sgt, %3, %4 : vector<1x1x8x32xi32>
    %6 = arith.extui %5 : vector<1x1x8x32xi1> to vector<1x1x8x32xi32>
    %7 = arith.sitofp %6 : vector<1x1x8x32xi32> to vector<1x1x8x32xf32>
    %c7_i32 = arith.constant 7 : i32
    %8 = vector.broadcast %c7_i32 : i32 to vector<1x1x8x32xi32>
    %9 = arith.cmpi slt, %3, %8 : vector<1x1x8x32xi32>
    %10 = arith.extui %9 : vector<1x1x8x32xi1> to vector<1x1x8x32xi32>
    %11 = arith.sitofp %10 : vector<1x1x8x32xi32> to vector<1x1x8x32xf32>
    %c0_7 = arith.constant 0 : index
    %c0_8 = arith.constant 0 : index
    %c0_9 = arith.constant 0 : index
    %c0_10 = arith.constant 0 : index
    %12 = vector.load %arg1[%c0_7, %c0_8, %c0_9, %c0_10] : memref<1x8x8x32xf32, #tpu.memory_space<vmem>>, vector<1x8x8x32xf32>
    %cst = arith.constant 0.000000e+00 : f32
    %13 = vector.broadcast %cst : f32 to vector<1x1x8x32xf32>
    %14 = vector.extract_strided_slice %12 {offsets = [0, 0, 0, 0], sizes = [1, 7, 8, 32], strides = [1, 1, 1, 1]} : vector<1x8x8x32xf32> to vector<1x7x8x32xf32>
    %15 = tpu.concatenate %13, %14 in 1 : vector<1x1x8x32xf32>, vector<1x7x8x32xf32> -> vector<1x8x8x32xf32>
    %16 = vector.extract_strided_slice %12 {offsets = [0, 1, 0, 0], sizes = [1, 7, 8, 32], strides = [1, 1, 1, 1]} : vector<1x8x8x32xf32> to vector<1x7x8x32xf32>
    %17 = tpu.concatenate %16, %13 in 1 : vector<1x7x8x32xf32>, vector<1x1x8x32xf32> -> vector<1x8x8x32xf32>
    %c1_i32 = arith.constant 1 : i32
    %18 = tpu.dynamic_rotate %15 by %c1_i32 dim 2 : vector<1x8x8x32xf32>, i32 -> vector<1x8x8x32xf32>
    %19 = vector.broadcast %7 : vector<1x1x8x32xf32> to vector<1x8x8x32xf32>
    %20 = arith.mulf %18, %19 : vector<1x8x8x32xf32>
    %c7_i32_11 = arith.constant 7 : i32
    %21 = tpu.dynamic_rotate %15 by %c7_i32_11 dim 2 : vector<1x8x8x32xf32>, i32 -> vector<1x8x8x32xf32>
    %22 = vector.broadcast %11 : vector<1x1x8x32xf32> to vector<1x8x8x32xf32>
    %23 = arith.mulf %21, %22 : vector<1x8x8x32xf32>
    %24 = vector.extract_strided_slice %0 {offsets = [0, 0, 0, 0], sizes = [1, 1, 1, 32], strides = [1, 1, 1, 1]} : vector<3x3x3x32xf32> to vector<1x1x1x32xf32>
    %25 = vector.shape_cast %24 : vector<1x1x1x32xf32> to vector<32xf32>
    %26 = vector.shape_cast %25 : vector<32xf32> to vector<1x1x1x32xf32>
    %27 = vector.broadcast %26 : vector<1x1x1x32xf32> to vector<1x8x8x32xf32>
    %28 = arith.mulf %20, %27 : vector<1x8x8x32xf32>
    %29 = vector.extract_strided_slice %0 {offsets = [1, 0, 0, 0], sizes = [1, 1, 1, 32], strides = [1, 1, 1, 1]} : vector<3x3x3x32xf32> to vector<1x1x1x32xf32>
    %30 = vector.shape_cast %29 : vector<1x1x1x32xf32> to vector<32xf32>
    %31 = vector.shape_cast %30 : vector<32xf32> to vector<1x1x1x32xf32>
    %32 = vector.broadcast %31 : vector<1x1x1x32xf32> to vector<1x8x8x32xf32>
    %33 = arith.mulf %20, %32 : vector<1x8x8x32xf32>
    %34 = vector.extract_strided_slice %0 {offsets = [2, 0, 0, 0], sizes = [1, 1, 1, 32], strides = [1, 1, 1, 1]} : vector<3x3x3x32xf32> to vector<1x1x1x32xf32>
    %35 = vector.shape_cast %34 : vector<1x1x1x32xf32> to vector<32xf32>
    %36 = vector.shape_cast %35 : vector<32xf32> to vector<1x1x1x32xf32>
    %37 = vector.broadcast %36 : vector<1x1x1x32xf32> to vector<1x8x8x32xf32>
    %38 = arith.mulf %20, %37 : vector<1x8x8x32xf32>
    %39 = vector.extract_strided_slice %0 {offsets = [0, 0, 1, 0], sizes = [1, 1, 1, 32], strides = [1, 1, 1, 1]} : vector<3x3x3x32xf32> to vector<1x1x1x32xf32>
    %40 = vector.shape_cast %39 : vector<1x1x1x32xf32> to vector<32xf32>
    %41 = vector.shape_cast %40 : vector<32xf32> to vector<1x1x1x32xf32>
    %42 = vector.broadcast %41 : vector<1x1x1x32xf32> to vector<1x8x8x32xf32>
    %43 = arith.mulf %15, %42 : vector<1x8x8x32xf32>
    %44 = arith.addf %28, %43 : vector<1x8x8x32xf32>
    %45 = vector.extract_strided_slice %0 {offsets = [1, 0, 1, 0], sizes = [1, 1, 1, 32], strides = [1, 1, 1, 1]} : vector<3x3x3x32xf32> to vector<1x1x1x32xf32>
    %46 = vector.shape_cast %45 : vector<1x1x1x32xf32> to vector<32xf32>
    %47 = vector.shape_cast %46 : vector<32xf32> to vector<1x1x1x32xf32>
    %48 = vector.broadcast %47 : vector<1x1x1x32xf32> to vector<1x8x8x32xf32>
    %49 = arith.mulf %15, %48 : vector<1x8x8x32xf32>
    %50 = arith.addf %33, %49 : vector<1x8x8x32xf32>
    %51 = vector.extract_strided_slice %0 {offsets = [2, 0, 1, 0], sizes = [1, 1, 1, 32], strides = [1, 1, 1, 1]} : vector<3x3x3x32xf32> to vector<1x1x1x32xf32>
    %52 = vector.shape_cast %51 : vector<1x1x1x32xf32> to vector<32xf32>
    %53 = vector.shape_cast %52 : vector<32xf32> to vector<1x1x1x32xf32>
    %54 = vector.broadcast %53 : vector<1x1x1x32xf32> to vector<1x8x8x32xf32>
    %55 = arith.mulf %15, %54 : vector<1x8x8x32xf32>
    %56 = arith.addf %38, %55 : vector<1x8x8x32xf32>
    %57 = vector.extract_strided_slice %0 {offsets = [0, 0, 2, 0], sizes = [1, 1, 1, 32], strides = [1, 1, 1, 1]} : vector<3x3x3x32xf32> to vector<1x1x1x32xf32>
    %58 = vector.shape_cast %57 : vector<1x1x1x32xf32> to vector<32xf32>
    %59 = vector.shape_cast %58 : vector<32xf32> to vector<1x1x1x32xf32>
    %60 = vector.broadcast %59 : vector<1x1x1x32xf32> to vector<1x8x8x32xf32>
    %61 = arith.mulf %23, %60 : vector<1x8x8x32xf32>
    %62 = arith.addf %44, %61 : vector<1x8x8x32xf32>
    %63 = vector.extract_strided_slice %0 {offsets = [1, 0, 2, 0], sizes = [1, 1, 1, 32], strides = [1, 1, 1, 1]} : vector<3x3x3x32xf32> to vector<1x1x1x32xf32>
    %64 = vector.shape_cast %63 : vector<1x1x1x32xf32> to vector<32xf32>
    %65 = vector.shape_cast %64 : vector<32xf32> to vector<1x1x1x32xf32>
    %66 = vector.broadcast %65 : vector<1x1x1x32xf32> to vector<1x8x8x32xf32>
    %67 = arith.mulf %23, %66 : vector<1x8x8x32xf32>
    %68 = arith.addf %50, %67 : vector<1x8x8x32xf32>
    %69 = vector.extract_strided_slice %0 {offsets = [2, 0, 2, 0], sizes = [1, 1, 1, 32], strides = [1, 1, 1, 1]} : vector<3x3x3x32xf32> to vector<1x1x1x32xf32>
    %70 = vector.shape_cast %69 : vector<1x1x1x32xf32> to vector<32xf32>
    %71 = vector.shape_cast %70 : vector<32xf32> to vector<1x1x1x32xf32>
    %72 = vector.broadcast %71 : vector<1x1x1x32xf32> to vector<1x8x8x32xf32>
    %73 = arith.mulf %23, %72 : vector<1x8x8x32xf32>
    %74 = arith.addf %56, %73 : vector<1x8x8x32xf32>
    %c1_i32_12 = arith.constant 1 : i32
    %75 = tpu.dynamic_rotate %12 by %c1_i32_12 dim 2 : vector<1x8x8x32xf32>, i32 -> vector<1x8x8x32xf32>
    %76 = vector.broadcast %7 : vector<1x1x8x32xf32> to vector<1x8x8x32xf32>
    %77 = arith.mulf %75, %76 : vector<1x8x8x32xf32>
    %c7_i32_13 = arith.constant 7 : i32
    %78 = tpu.dynamic_rotate %12 by %c7_i32_13 dim 2 : vector<1x8x8x32xf32>, i32 -> vector<1x8x8x32xf32>
    %79 = vector.broadcast %11 : vector<1x1x8x32xf32> to vector<1x8x8x32xf32>
    %80 = arith.mulf %78, %79 : vector<1x8x8x32xf32>
    %81 = vector.extract_strided_slice %0 {offsets = [0, 1, 0, 0], sizes = [1, 1, 1, 32], strides = [1, 1, 1, 1]} : vector<3x3x3x32xf32> to vector<1x1x1x32xf32>
    %82 = vector.shape_cast %81 : vector<1x1x1x32xf32> to vector<32xf32>
    %83 = vector.shape_cast %82 : vector<32xf32> to vector<1x1x1x32xf32>
    %84 = vector.broadcast %83 : vector<1x1x1x32xf32> to vector<1x8x8x32xf32>
    %85 = arith.mulf %77, %84 : vector<1x8x8x32xf32>
    %86 = arith.addf %62, %85 : vector<1x8x8x32xf32>
    %87 = vector.extract_strided_slice %0 {offsets = [1, 1, 0, 0], sizes = [1, 1, 1, 32], strides = [1, 1, 1, 1]} : vector<3x3x3x32xf32> to vector<1x1x1x32xf32>
    %88 = vector.shape_cast %87 : vector<1x1x1x32xf32> to vector<32xf32>
    %89 = vector.shape_cast %88 : vector<32xf32> to vector<1x1x1x32xf32>
    %90 = vector.broadcast %89 : vector<1x1x1x32xf32> to vector<1x8x8x32xf32>
    %91 = arith.mulf %77, %90 : vector<1x8x8x32xf32>
    %92 = arith.addf %68, %91 : vector<1x8x8x32xf32>
    %93 = vector.extract_strided_slice %0 {offsets = [2, 1, 0, 0], sizes = [1, 1, 1, 32], strides = [1, 1, 1, 1]} : vector<3x3x3x32xf32> to vector<1x1x1x32xf32>
    %94 = vector.shape_cast %93 : vector<1x1x1x32xf32> to vector<32xf32>
    %95 = vector.shape_cast %94 : vector<32xf32> to vector<1x1x1x32xf32>
    %96 = vector.broadcast %95 : vector<1x1x1x32xf32> to vector<1x8x8x32xf32>
    %97 = arith.mulf %77, %96 : vector<1x8x8x32xf32>
    %98 = arith.addf %74, %97 : vector<1x8x8x32xf32>
    %99 = vector.extract_strided_slice %0 {offsets = [0, 1, 1, 0], sizes = [1, 1, 1, 32], strides = [1, 1, 1, 1]} : vector<3x3x3x32xf32> to vector<1x1x1x32xf32>
    %100 = vector.shape_cast %99 : vector<1x1x1x32xf32> to vector<32xf32>
    %101 = vector.shape_cast %100 : vector<32xf32> to vector<1x1x1x32xf32>
    %102 = vector.broadcast %101 : vector<1x1x1x32xf32> to vector<1x8x8x32xf32>
    %103 = arith.mulf %12, %102 : vector<1x8x8x32xf32>
    %104 = arith.addf %86, %103 : vector<1x8x8x32xf32>
    %105 = vector.extract_strided_slice %0 {offsets = [1, 1, 1, 0], sizes = [1, 1, 1, 32], strides = [1, 1, 1, 1]} : vector<3x3x3x32xf32> to vector<1x1x1x32xf32>
    %106 = vector.shape_cast %105 : vector<1x1x1x32xf32> to vector<32xf32>
    %107 = vector.shape_cast %106 : vector<32xf32> to vector<1x1x1x32xf32>
    %108 = vector.broadcast %107 : vector<1x1x1x32xf32> to vector<1x8x8x32xf32>
    %109 = arith.mulf %12, %108 : vector<1x8x8x32xf32>
    %110 = arith.addf %92, %109 : vector<1x8x8x32xf32>
    %111 = vector.extract_strided_slice %0 {offsets = [2, 1, 1, 0], sizes = [1, 1, 1, 32], strides = [1, 1, 1, 1]} : vector<3x3x3x32xf32> to vector<1x1x1x32xf32>
    %112 = vector.shape_cast %111 : vector<1x1x1x32xf32> to vector<32xf32>
    %113 = vector.shape_cast %112 : vector<32xf32> to vector<1x1x1x32xf32>
    %114 = vector.broadcast %113 : vector<1x1x1x32xf32> to vector<1x8x8x32xf32>
    %115 = arith.mulf %12, %114 : vector<1x8x8x32xf32>
    %116 = arith.addf %98, %115 : vector<1x8x8x32xf32>
    %117 = vector.extract_strided_slice %0 {offsets = [0, 1, 2, 0], sizes = [1, 1, 1, 32], strides = [1, 1, 1, 1]} : vector<3x3x3x32xf32> to vector<1x1x1x32xf32>
    %118 = vector.shape_cast %117 : vector<1x1x1x32xf32> to vector<32xf32>
    %119 = vector.shape_cast %118 : vector<32xf32> to vector<1x1x1x32xf32>
    %120 = vector.broadcast %119 : vector<1x1x1x32xf32> to vector<1x8x8x32xf32>
    %121 = arith.mulf %80, %120 : vector<1x8x8x32xf32>
    %122 = arith.addf %104, %121 : vector<1x8x8x32xf32>
    %123 = vector.extract_strided_slice %0 {offsets = [1, 1, 2, 0], sizes = [1, 1, 1, 32], strides = [1, 1, 1, 1]} : vector<3x3x3x32xf32> to vector<1x1x1x32xf32>
    %124 = vector.shape_cast %123 : vector<1x1x1x32xf32> to vector<32xf32>
    %125 = vector.shape_cast %124 : vector<32xf32> to vector<1x1x1x32xf32>
    %126 = vector.broadcast %125 : vector<1x1x1x32xf32> to vector<1x8x8x32xf32>
    %127 = arith.mulf %80, %126 : vector<1x8x8x32xf32>
    %128 = arith.addf %110, %127 : vector<1x8x8x32xf32>
    %129 = vector.extract_strided_slice %0 {offsets = [2, 1, 2, 0], sizes = [1, 1, 1, 32], strides = [1, 1, 1, 1]} : vector<3x3x3x32xf32> to vector<1x1x1x32xf32>
    %130 = vector.shape_cast %129 : vector<1x1x1x32xf32> to vector<32xf32>
    %131 = vector.shape_cast %130 : vector<32xf32> to vector<1x1x1x32xf32>
    %132 = vector.broadcast %131 : vector<1x1x1x32xf32> to vector<1x8x8x32xf32>
    %133 = arith.mulf %80, %132 : vector<1x8x8x32xf32>
    %134 = arith.addf %116, %133 : vector<1x8x8x32xf32>
    %c1_i32_14 = arith.constant 1 : i32
    %135 = tpu.dynamic_rotate %17 by %c1_i32_14 dim 2 : vector<1x8x8x32xf32>, i32 -> vector<1x8x8x32xf32>
    %136 = vector.broadcast %7 : vector<1x1x8x32xf32> to vector<1x8x8x32xf32>
    %137 = arith.mulf %135, %136 : vector<1x8x8x32xf32>
    %c7_i32_15 = arith.constant 7 : i32
    %138 = tpu.dynamic_rotate %17 by %c7_i32_15 dim 2 : vector<1x8x8x32xf32>, i32 -> vector<1x8x8x32xf32>
    %139 = vector.broadcast %11 : vector<1x1x8x32xf32> to vector<1x8x8x32xf32>
    %140 = arith.mulf %138, %139 : vector<1x8x8x32xf32>
    %141 = vector.extract_strided_slice %0 {offsets = [0, 2, 0, 0], sizes = [1, 1, 1, 32], strides = [1, 1, 1, 1]} : vector<3x3x3x32xf32> to vector<1x1x1x32xf32>
    %142 = vector.shape_cast %141 : vector<1x1x1x32xf32> to vector<32xf32>
    %143 = vector.shape_cast %142 : vector<32xf32> to vector<1x1x1x32xf32>
    %144 = vector.broadcast %143 : vector<1x1x1x32xf32> to vector<1x8x8x32xf32>
    %145 = arith.mulf %137, %144 : vector<1x8x8x32xf32>
    %146 = arith.addf %122, %145 : vector<1x8x8x32xf32>
    %147 = vector.extract_strided_slice %0 {offsets = [1, 2, 0, 0], sizes = [1, 1, 1, 32], strides = [1, 1, 1, 1]} : vector<3x3x3x32xf32> to vector<1x1x1x32xf32>
    %148 = vector.shape_cast %147 : vector<1x1x1x32xf32> to vector<32xf32>
    %149 = vector.shape_cast %148 : vector<32xf32> to vector<1x1x1x32xf32>
    %150 = vector.broadcast %149 : vector<1x1x1x32xf32> to vector<1x8x8x32xf32>
    %151 = arith.mulf %137, %150 : vector<1x8x8x32xf32>
    %152 = arith.addf %128, %151 : vector<1x8x8x32xf32>
    %153 = vector.extract_strided_slice %0 {offsets = [2, 2, 0, 0], sizes = [1, 1, 1, 32], strides = [1, 1, 1, 1]} : vector<3x3x3x32xf32> to vector<1x1x1x32xf32>
    %154 = vector.shape_cast %153 : vector<1x1x1x32xf32> to vector<32xf32>
    %155 = vector.shape_cast %154 : vector<32xf32> to vector<1x1x1x32xf32>
    %156 = vector.broadcast %155 : vector<1x1x1x32xf32> to vector<1x8x8x32xf32>
    %157 = arith.mulf %137, %156 : vector<1x8x8x32xf32>
    %158 = arith.addf %134, %157 : vector<1x8x8x32xf32>
    %159 = vector.extract_strided_slice %0 {offsets = [0, 2, 1, 0], sizes = [1, 1, 1, 32], strides = [1, 1, 1, 1]} : vector<3x3x3x32xf32> to vector<1x1x1x32xf32>
    %160 = vector.shape_cast %159 : vector<1x1x1x32xf32> to vector<32xf32>
    %161 = vector.shape_cast %160 : vector<32xf32> to vector<1x1x1x32xf32>
    %162 = vector.broadcast %161 : vector<1x1x1x32xf32> to vector<1x8x8x32xf32>
    %163 = arith.mulf %17, %162 : vector<1x8x8x32xf32>
    %164 = arith.addf %146, %163 : vector<1x8x8x32xf32>
    %165 = vector.extract_strided_slice %0 {offsets = [1, 2, 1, 0], sizes = [1, 1, 1, 32], strides = [1, 1, 1, 1]} : vector<3x3x3x32xf32> to vector<1x1x1x32xf32>
    %166 = vector.shape_cast %165 : vector<1x1x1x32xf32> to vector<32xf32>
    %167 = vector.shape_cast %166 : vector<32xf32> to vector<1x1x1x32xf32>
    %168 = vector.broadcast %167 : vector<1x1x1x32xf32> to vector<1x8x8x32xf32>
    %169 = arith.mulf %17, %168 : vector<1x8x8x32xf32>
    %170 = arith.addf %152, %169 : vector<1x8x8x32xf32>
    %171 = vector.extract_strided_slice %0 {offsets = [2, 2, 1, 0], sizes = [1, 1, 1, 32], strides = [1, 1, 1, 1]} : vector<3x3x3x32xf32> to vector<1x1x1x32xf32>
    %172 = vector.shape_cast %171 : vector<1x1x1x32xf32> to vector<32xf32>
    %173 = vector.shape_cast %172 : vector<32xf32> to vector<1x1x1x32xf32>
    %174 = vector.broadcast %173 : vector<1x1x1x32xf32> to vector<1x8x8x32xf32>
    %175 = arith.mulf %17, %174 : vector<1x8x8x32xf32>
    %176 = arith.addf %158, %175 : vector<1x8x8x32xf32>
    %177 = vector.extract_strided_slice %0 {offsets = [0, 2, 2, 0], sizes = [1, 1, 1, 32], strides = [1, 1, 1, 1]} : vector<3x3x3x32xf32> to vector<1x1x1x32xf32>
    %178 = vector.shape_cast %177 : vector<1x1x1x32xf32> to vector<32xf32>
    %179 = vector.shape_cast %178 : vector<32xf32> to vector<1x1x1x32xf32>
    %180 = vector.broadcast %179 : vector<1x1x1x32xf32> to vector<1x8x8x32xf32>
    %181 = arith.mulf %140, %180 : vector<1x8x8x32xf32>
    %182 = arith.addf %164, %181 : vector<1x8x8x32xf32>
    %183 = vector.extract_strided_slice %0 {offsets = [1, 2, 2, 0], sizes = [1, 1, 1, 32], strides = [1, 1, 1, 1]} : vector<3x3x3x32xf32> to vector<1x1x1x32xf32>
    %184 = vector.shape_cast %183 : vector<1x1x1x32xf32> to vector<32xf32>
    %185 = vector.shape_cast %184 : vector<32xf32> to vector<1x1x1x32xf32>
    %186 = vector.broadcast %185 : vector<1x1x1x32xf32> to vector<1x8x8x32xf32>
    %187 = arith.mulf %140, %186 : vector<1x8x8x32xf32>
    %188 = arith.addf %170, %187 : vector<1x8x8x32xf32>
    %189 = vector.extract_strided_slice %0 {offsets = [2, 2, 2, 0], sizes = [1, 1, 1, 32], strides = [1, 1, 1, 1]} : vector<3x3x3x32xf32> to vector<1x1x1x32xf32>
    %190 = vector.shape_cast %189 : vector<1x1x1x32xf32> to vector<32xf32>
    %191 = vector.shape_cast %190 : vector<32xf32> to vector<1x1x1x32xf32>
    %192 = vector.broadcast %191 : vector<1x1x1x32xf32> to vector<1x8x8x32xf32>
    %193 = arith.mulf %140, %192 : vector<1x8x8x32xf32>
    %194 = arith.addf %176, %193 : vector<1x8x8x32xf32>
    %195 = vector.extract_strided_slice %1 {offsets = [0, 0], sizes = [1, 32], strides = [1, 1]} : vector<3x32xf32> to vector<1x32xf32>
    %196 = vector.shape_cast %195 : vector<1x32xf32> to vector<32xf32>
    %197 = vector.shape_cast %196 : vector<32xf32> to vector<1x1x1x32xf32>
    %198 = vector.broadcast %197 : vector<1x1x1x32xf32> to vector<1x8x8x32xf32>
    %199 = arith.addf %182, %198 : vector<1x8x8x32xf32>
    %cst_16 = arith.constant 0.000000e+00 : f32
    %200 = vector.broadcast %cst_16 : f32 to vector<1x8x8x32xf32>
    %201 = arith.maximumf %199, %200 : vector<1x8x8x32xf32>
    %202 = vector.extract_strided_slice %1 {offsets = [1, 0], sizes = [1, 32], strides = [1, 1]} : vector<3x32xf32> to vector<1x32xf32>
    %203 = vector.shape_cast %202 : vector<1x32xf32> to vector<32xf32>
    %204 = vector.shape_cast %203 : vector<32xf32> to vector<1x1x1x32xf32>
    %205 = vector.broadcast %204 : vector<1x1x1x32xf32> to vector<1x8x8x32xf32>
    %206 = arith.addf %188, %205 : vector<1x8x8x32xf32>
    %cst_17 = arith.constant 0.000000e+00 : f32
    %207 = vector.broadcast %cst_17 : f32 to vector<1x8x8x32xf32>
    %208 = arith.maximumf %206, %207 : vector<1x8x8x32xf32>
    %209 = vector.extract_strided_slice %1 {offsets = [2, 0], sizes = [1, 32], strides = [1, 1]} : vector<3x32xf32> to vector<1x32xf32>
    %210 = vector.shape_cast %209 : vector<1x32xf32> to vector<32xf32>
    %211 = vector.shape_cast %210 : vector<32xf32> to vector<1x1x1x32xf32>
    %212 = vector.broadcast %211 : vector<1x1x1x32xf32> to vector<1x8x8x32xf32>
    %213 = arith.addf %194, %212 : vector<1x8x8x32xf32>
    %cst_18 = arith.constant 0.000000e+00 : f32
    %214 = vector.broadcast %cst_18 : f32 to vector<1x8x8x32xf32>
    %215 = arith.maximumf %213, %214 : vector<1x8x8x32xf32>
    %216 = vector.shape_cast %201 : vector<1x8x8x32xf32> to vector<64x32xf32>
    %c0_19 = arith.constant 0 : index
    %c0_20 = arith.constant 0 : index
    %c0_21 = arith.constant 0 : index
    %217 = vector.load %arg4[%c0_19, %c0_20, %c0_21] : memref<3x32x32xf32, #tpu.memory_space<vmem>>, vector<1x32x32xf32>
    %218 = vector.shape_cast %217 : vector<1x32x32xf32> to vector<32x32xf32>
    %cst_22 = arith.constant dense<0.000000e+00> : vector<64x32xf32>
    %219 = tpu.matmul %216, %218, %cst_22 {dimension_numbers = #tpu.dot_dimension_numbers<[1], [0], [0], [1], [0, 0, 1, 1], [], []>} : vector<64x32xf32>, vector<32x32xf32>, vector<64x32xf32> -> vector<64x32xf32>
    %220 = vector.shape_cast %208 : vector<1x8x8x32xf32> to vector<64x32xf32>
    %c1 = arith.constant 1 : index
    %c0_23 = arith.constant 0 : index
    %c0_24 = arith.constant 0 : index
    %221 = vector.load %arg4[%c1, %c0_23, %c0_24] : memref<3x32x32xf32, #tpu.memory_space<vmem>>, vector<1x32x32xf32>
    %222 = vector.shape_cast %221 : vector<1x32x32xf32> to vector<32x32xf32>
    %cst_25 = arith.constant dense<0.000000e+00> : vector<64x32xf32>
    %223 = tpu.matmul %220, %222, %cst_25 {dimension_numbers = #tpu.dot_dimension_numbers<[1], [0], [0], [1], [0, 0, 1, 1], [], []>} : vector<64x32xf32>, vector<32x32xf32>, vector<64x32xf32> -> vector<64x32xf32>
    %224 = vector.shape_cast %215 : vector<1x8x8x32xf32> to vector<64x32xf32>
    %c2 = arith.constant 2 : index
    %c0_26 = arith.constant 0 : index
    %c0_27 = arith.constant 0 : index
    %225 = vector.load %arg4[%c2, %c0_26, %c0_27] : memref<3x32x32xf32, #tpu.memory_space<vmem>>, vector<1x32x32xf32>
    %226 = vector.shape_cast %225 : vector<1x32x32xf32> to vector<32x32xf32>
    %cst_28 = arith.constant dense<0.000000e+00> : vector<64x32xf32>
    %227 = tpu.matmul %224, %226, %cst_28 {dimension_numbers = #tpu.dot_dimension_numbers<[1], [0], [0], [1], [0, 0, 1, 1], [], []>} : vector<64x32xf32>, vector<32x32xf32>, vector<64x32xf32> -> vector<64x32xf32>
    %228 = tpu.concatenate %219, %223, %227 in 1 : vector<64x32xf32>, vector<64x32xf32>, vector<64x32xf32> -> vector<64x96xf32>
    %229 = vector.broadcast %2 : vector<1x96xf32> to vector<64x96xf32>
    %230 = arith.addf %228, %229 : vector<64x96xf32>
    %231 = vector.shape_cast %230 : vector<64x96xf32> to vector<1x64x96xf32>
    %c0_29 = arith.constant 0 : index
    %c0_30 = arith.constant 0 : index
    %c0_31 = arith.constant 0 : index
    %232 = vector.load %arg6[%c0_29, %c0_30, %c0_31] : memref<1x64x96xf32, #tpu.memory_space<vmem>>, vector<1x64x96xf32>
    tpu.vector_store %arg6[%c0_29, %c0_30, %c0_31], %231 {strides = array<i32>} : memref<1x64x96xf32, #tpu.memory_space<vmem>>, vector<1x64x96xf32>,
    return
  }
  func.func @transform_0(%arg0: i32) -> (i32, i32, i32, i32) {
    %c0_i32 = arith.constant 0 : i32
    %c0_i32_0 = arith.constant 0 : i32
    %c0_i32_1 = arith.constant 0 : i32
    %c0_i32_2 = arith.constant 0 : i32
    return %arg0, %c0_i32, %c0_i32_0, %c0_i32_1 : i32, i32, i32, i32
  }
  func.func @transform_1(%arg0: i32) -> (i32, i32, i32, i32) {
    %c0_i32 = arith.constant 0 : i32
    %c0_i32_0 = arith.constant 0 : i32
    %c0_i32_1 = arith.constant 0 : i32
    %c0_i32_2 = arith.constant 0 : i32
    %c0_i32_3 = arith.constant 0 : i32
    return %c0_i32, %c0_i32_0, %c0_i32_1, %c0_i32_2 : i32, i32, i32, i32
  }
  func.func @transform_2(%arg0: i32) -> (i32, i32) {
    %c0_i32 = arith.constant 0 : i32
    %c0_i32_0 = arith.constant 0 : i32
    %c0_i32_1 = arith.constant 0 : i32
    return %c0_i32, %c0_i32_0 : i32, i32
  }
  func.func @transform_3(%arg0: i32) -> (i32, i32, i32) {
    %c0_i32 = arith.constant 0 : i32
    %c0_i32_0 = arith.constant 0 : i32
    %c0_i32_1 = arith.constant 0 : i32
    %c0_i32_2 = arith.constant 0 : i32
    return %c0_i32, %c0_i32_0, %c0_i32_1 : i32, i32, i32
  }
  func.func @transform_4(%arg0: i32) -> (i32, i32) {
    %c0_i32 = arith.constant 0 : i32
    %c0_i32_0 = arith.constant 0 : i32
    %c0_i32_1 = arith.constant 0 : i32
    return %c0_i32, %c0_i32_0 : i32, i32
  }
  func.func @transform_5(%arg0: i32) -> (i32, i32, i32) {
    %c0_i32 = arith.constant 0 : i32
    %c0_i32_0 = arith.constant 0 : i32
    %c0_i32_1 = arith.constant 0 : i32
    return %arg0, %c0_i32, %c0_i32_0 : i32, i32, i32
  }
}

</mosaic_0001>

<llo_original>
// kernel: tpu_custom_call.1
$region0: #{tpu_custom_call.1}
  #allocation0 [shape = 'u32[]', space=smem, size = 0x4, offset = 0x4, fixed_abs, tag = 'smem constant byte address 0x4 - core index']
  #allocation1 [shape = 'u32[144,128]{1,0:T(1,128)}', space=vmem, size = 0x12000, scoped, tag = 'internal scratch']
  %s0 = inlined_call_operand.hbm [shape: f32[2,8,8,32], index: 0, kind: input, shape index: {}]
  %s1 = inlined_call_operand.hbm [shape: f32[3,3,3,32], index: 1, kind: input, shape index: {}]
  %s2 = inlined_call_operand.hbm [shape: f32[3,32], index: 2, kind: input, shape index: {}]
  %s3 = inlined_call_operand.hbm [shape: f32[3,32,32], index: 3, kind: input, shape index: {}]
  %s4 = inlined_call_operand.vmem [shape: f32[1,96], index: 4, kind: input, shape index: {}]
  %s5 = inlined_call_operand.hbm [shape: f32[2,64,96], index: 5, kind: output, shape index: {}]
  %s6 = sld [smem:[#allocation0]]
  $region69: #{tpu_custom_call.1} parent=0
    _
  %s8 = ssub.s32 1, %s6
  %s9 = scalar_select 0, %s8, %s6
  $region1: #{tpu_custom_call.1} parent=0
    #allocation2 [shape = 'u8[65536]{0}', space=vmem, size = 0x10000, scoped, tag = 'input window, operand 0']
    #allocation3 [shape = 's32[2]{0}', space=sflag, size = 0x8, scoped, tag = 'scoped memory for tpu_custom_call.1']
    #allocation4 [shape = 's32[2]{0}', space=sflag, size = 0x8, scoped, tag = 'scoped memory for tpu_custom_call.1']
    #allocation5 [shape = 'u8[18432]{0}', space=vmem, size = 0x4800, scoped, tag = 'input window, operand 1, single buffered']
    #allocation6 [shape = 's32[1]{0}', space=sflag, size = 0x4, scoped, tag = 'scoped memory for tpu_custom_call.1']
    #allocation7 [shape = 'u8[2048]{0}', space=vmem, size = 0x800, scoped, tag = 'input window, operand 2, single buffered']
    #allocation8 [shape = 'u8[49152]{0}', space=vmem, size = 0xc000, scoped, tag = 'input window, operand 3, single buffered']
    #allocation9 [shape = 's32[1]{0}', space=sflag, size = 0x4, scoped, tag = 'scoped memory for tpu_custom_call.1']
    #allocation10 [shape = 'u8[65536]{0}', space=vmem, size = 0x10000, scoped, tag = 'output window, operand 0']
    %10 = vsyncpa [#allocation3], 0
    %s11 = scalar_lea.sflag [#allocation3], 1
    %12 = vsyncpa %s11, 0
    %13 = vsyncpa [#allocation6], 0
    %14 = vsyncpa [#allocation9], 0
    %15 = vsyncpa [#allocation4], 0
    %s16 = scalar_lea.sflag [#allocation4], 1
    %17 = vsyncpa %s16, 0
    loop: start=0, step=1, limit=4
    $region2: #{tpu_custom_call.1} parent=1 // loop_pre_header
      _
    $region3: #{tpu_custom_call.1} parent=1 // loop_header
      %s19 = sphi 0, %s23
      %p20 = scmp.ge.s32.totalorder %s19, 4
      %s29 = sphi 0, %s31
      %s32 = sphi 0, %s29
      %s33 = sphi 0, %s32
      %s49 = sphi 0, %s33
      %s53 = sphi 0, %s53
      %s55 = sphi 0, %s53
      %s56 = sphi 0, %s55
      %s70 = sphi 0, %s56
      %s74 = sphi 0, %s74
      %s76 = sphi 0, %s74
      %s77 = sphi 0, %s76
      %s91 = sphi 0, %s77
      %s95 = sphi 0, %s95
      %s97 = sphi 0, %s95
      %s98 = sphi 0, %s97
      %s112 = sphi 0, %s98
      %s116 = sphi 0, %s116
      %s118 = sphi 0, %s116
      %s119 = sphi 0, %s118
      %s133 = sphi 0, %s119
      %s139 = sphi 0, %s141
      %s142 = sphi 0, %s139
      %s143 = sphi 0, %s142
      %s159 = sphi 0, %s143
    $region4: #{tpu_custom_call.1} parent=1 // loop_header_branch
      %22 = sbr.rel (%p20) target = $region8
    $region5: #{tpu_custom_call.1} parent=1 // loop_body
      %s24 = ssub.s32 %s19, 1
      %s25 = ssub.s32 %s19, 2
      %s26 = sadd.s32 %s19, 1
      %s27 = ssub.s32 %s19, %s26
      %p28 = scmp.eq.s32.totalorder %s27, 0
      %s30 = sadd.s32 %s29, 1
      %s31 = scalar_select %p28, %s29, %s30
      %p34 = pneg %p28
      %p35 = scmp.eq.s32.totalorder %s19, 1
      %p36 = por %p34, %p35
      %p37 = scmp.ne.s32.totalorder %s29, %s32
      %p38 = scmp.eq.s32.totalorder %s19, 0
      %p39 = por %p37, %p38
      %p40 = scmp.ne.s32.totalorder %s29, %s32
      %p41 = scmp.eq.s32.totalorder %s24, 1
      %p42 = por %p40, %p41
      %p43 = scmp.ne.s32.totalorder %s32, %s33
      %p44 = scmp.eq.s32.totalorder %s24, 0
      %p45 = por %p43, %p44
      %p46 = scmp.ne.s32.totalorder %s32, %s33
      %p47 = scmp.eq.s32.totalorder %s25, 1
      %p48 = por %p46, %p47
      %p50 = scmp.ne.s32.totalorder %s33, %s49
      %p51 = scmp.eq.s32.totalorder %s25, 0
      %p52 = por %p50, %p51
      %s54 = sadd.s32 %s53, 1
      %p57 = scmp.eq.s32.totalorder %s19, 1
      %p58 = scmp.ne.s32.totalorder %s53, %s55
      %p59 = scmp.eq.s32.totalorder %s19, 0
      %p60 = por %p58, %p59
      %p61 = scmp.ne.s32.totalorder %s53, %s55
      %p62 = scmp.eq.s32.totalorder %s24, 1
      %p63 = por %p61, %p62
      %p64 = scmp.ne.s32.totalorder %s55, %s56
      %p65 = scmp.eq.s32.totalorder %s24, 0
      %p66 = por %p64, %p65
      %p67 = scmp.ne.s32.totalorder %s55, %s56
      %p68 = scmp.eq.s32.totalorder %s25, 1
      %p69 = por %p67, %p68
      %p71 = scmp.ne.s32.totalorder %s56, %s70
      %p72 = scmp.eq.s32.totalorder %s25, 0
      %p73 = por %p71, %p72
      %s75 = sadd.s32 %s74, 1
      %p78 = scmp.eq.s32.totalorder %s19, 1
      %p79 = scmp.ne.s32.totalorder %s74, %s76
      %p80 = scmp.eq.s32.totalorder %s19, 0
      %p81 = por %p79, %p80
      %p82 = scmp.ne.s32.totalorder %s74, %s76
      %p83 = scmp.eq.s32.totalorder %s24, 1
      %p84 = por %p82, %p83
      %p85 = scmp.ne.s32.totalorder %s76, %s77
      %p86 = scmp.eq.s32.totalorder %s24, 0
      %p87 = por %p85, %p86
      %p88 = scmp.ne.s32.totalorder %s76, %s77
      %p89 = scmp.eq.s32.totalorder %s25, 1
      %p90 = por %p88, %p89
      %p92 = scmp.ne.s32.totalorder %s77, %s91
      %p93 = scmp.eq.s32.totalorder %s25, 0
      %p94 = por %p92, %p93
      %s96 = sadd.s32 %s95, 1
      %p99 = scmp.eq.s32.totalorder %s19, 1
      %p100 = scmp.ne.s32.totalorder %s95, %s97
      %p101 = scmp.eq.s32.totalorder %s19, 0
      %p102 = por %p100, %p101
      %p103 = scmp.ne.s32.totalorder %s95, %s97
      %p104 = scmp.eq.s32.totalorder %s24, 1
      %p105 = por %p103, %p104
      %p106 = scmp.ne.s32.totalorder %s97, %s98
      %p107 = scmp.eq.s32.totalorder %s24, 0
      %p108 = por %p106, %p107
      %p109 = scmp.ne.s32.totalorder %s97, %s98
      %p110 = scmp.eq.s32.totalorder %s25, 1
      %p111 = por %p109, %p110
      %p113 = scmp.ne.s32.totalorder %s98, %s112
      %p114 = scmp.eq.s32.totalorder %s25, 0
      %p115 = por %p113, %p114
      %s117 = sadd.s32 %s116, 1
      %p120 = scmp.eq.s32.totalorder %s19, 1
      %p121 = scmp.ne.s32.totalorder %s116, %s118
      %p122 = scmp.eq.s32.totalorder %s19, 0
      %p123 = por %p121, %p122
      %p124 = scmp.ne.s32.totalorder %s116, %s118
      %p125 = scmp.eq.s32.totalorder %s24, 1
      %p126 = por %p124, %p125
      %p127 = scmp.ne.s32.totalorder %s118, %s119
      %p128 = scmp.eq.s32.totalorder %s24, 0
      %p129 = por %p127, %p128
      %p130 = scmp.ne.s32.totalorder %s118, %s119
      %p131 = scmp.eq.s32.totalorder %s25, 1
      %p132 = por %p130, %p131
      %p134 = scmp.ne.s32.totalorder %s119, %s133
      %p135 = scmp.eq.s32.totalorder %s25, 0
      %p136 = por %p134, %p135
      %s137 = ssub.s32 %s19, %s26
      %p138 = scmp.eq.s32.totalorder %s137, 0
      %s140 = sadd.s32 %s139, 1
      %s141 = scalar_select %p138, %s139, %s140
      %p144 = pneg %p138
      %p145 = scmp.eq.s32.totalorder %s19, 1
      %p146 = por %p144, %p145
      %p147 = scmp.ne.s32.totalorder %s139, %s142
      %p148 = scmp.eq.s32.totalorder %s19, 0
      %p149 = por %p147, %p148
      %p150 = scmp.ne.s32.totalorder %s139, %s142
      %p151 = scmp.eq.s32.totalorder %s24, 1
      %p152 = por %p150, %p151
      %p153 = scmp.ne.s32.totalorder %s142, %s143
      %p154 = scmp.eq.s32.totalorder %s24, 0
      %p155 = por %p153, %p154
      %p156 = scmp.ne.s32.totalorder %s142, %s143
      %p157 = scmp.eq.s32.totalorder %s25, 1
      %p158 = por %p156, %p157
      %p160 = scmp.ne.s32.totalorder %s143, %s159
      %p161 = scmp.eq.s32.totalorder %s25, 0
      %p162 = por %p160, %p161
      %p163 = scmp.le.s32.totalorder 1, %s19
      %p164 = scmp.lt.s32.totalorder %s19, 3
      %p165 = pnand %p163, %p164
      %p166 = pneg %p165
      // Predicated region
      $region9: #{tpu_custom_call.1} parent=5 // pred_check
        _
      $region10: #{tpu_custom_call.1} parent=5 // pred_check_branch
        %168 = sbr.rel (%p165) target = $region12
      $region11: #{tpu_custom_call.1} parent=5 // pred_region
        %s169 = ssub.s32 %s19, 1
        // Predicated region
        $region13: #{tpu_custom_call.1} parent=11 // pred_check
          %p170 = pneg %p66
        $region14: #{tpu_custom_call.1} parent=11 // pred_check_branch
          %172 = sbr.rel (%p170) target = $region16
        $region15: #{tpu_custom_call.1} parent=11 // pred_region
          %s174 = ssub.s32 576, 576
          %175 = vsyncadd [#allocation6], %s174
          %s176 = sshll.u32 [#allocation5], 4
          %s177 = int_to_ptr.vmem [resolvable:$true] %s176
          %182 = dma.hbm_to_vmem [thread:$0]  %s1, 576, %s177, [#allocation6], 64, 64, 4
        $region16: #{tpu_custom_call.1} parent=11 // pred_fallthru
          _
        // Predicated region
        $region17: #{tpu_custom_call.1} parent=11 // pred_check
          %p183 = pneg %p87
        $region18: #{tpu_custom_call.1} parent=11 // pred_check_branch
          %185 = sbr.rel (%p183) target = $region20
        $region19: #{tpu_custom_call.1} parent=11 // pred_region
          %s187 = ssub.s32 64, 64
          %188 = vsyncadd [#allocation6], %s187
          %s190 = sshll.u32 [#allocation7], 4
          %s191 = int_to_ptr.vmem [resolvable:$true] %s190
          %193 = dma.hbm_to_vmem [thread:$0]  %s2, 64, %s191, [#allocation6]
        $region20: #{tpu_custom_call.1} parent=11 // pred_fallthru
          _
        // Predicated region
        $region21: #{tpu_custom_call.1} parent=11 // pred_check
          %p194 = pneg %p108
        $region22: #{tpu_custom_call.1} parent=11 // pred_check_branch
          %196 = sbr.rel (%p194) target = $region24
        $region23: #{tpu_custom_call.1} parent=11 // pred_region
          %s198 = ssub.s32 1536, 1536
          %199 = vsyncadd [#allocation9], %s198
          %s200 = sshll.u32 [#allocation8], 4
          %s201 = int_to_ptr.vmem [resolvable:$true] %s200
          %206 = dma.hbm_to_vmem [thread:$0]  %s3, 1536, %s201, [#allocation9], 128, 128, 8
        $region24: #{tpu_custom_call.1} parent=11 // pred_fallthru
          _
        // Predicated region
        $region25: #{tpu_custom_call.1} parent=11 // pred_check
          %p207 = pneg %p129
        $region26: #{tpu_custom_call.1} parent=11 // pred_check_branch
          %209 = sbr.rel (%p207) target = $region28
        $region27: #{tpu_custom_call.1} parent=11 // pred_region
          _
        $region28: #{tpu_custom_call.1} parent=11 // pred_fallthru
          _
      $region12: #{tpu_custom_call.1} parent=5 // pred_fallthru
        _
      %p210 = scmp.lt.s32.totalorder %s19, 2
      // Predicated region
      $region29: #{tpu_custom_call.1} parent=5 // pred_check
        %p211 = pneg %p210
      $region30: #{tpu_custom_call.1} parent=5 // pred_check_branch
        %213 = sbr.rel (%p211) target = $region32
      $region31: #{tpu_custom_call.1} parent=5 // pred_region
        // Predicated region
        $region33: #{tpu_custom_call.1} parent=31 // pred_check
          %p214 = pneg %p39
        $region34: #{tpu_custom_call.1} parent=31 // pred_check_branch
          %216 = sbr.rel (%p214) target = $region36
        $region35: #{tpu_custom_call.1} parent=31 // pred_region
          %s217 = sand.u32 %s29, 1
          %s218 = scalar_lea.sflag [#allocation3], %s217
          %s219 = sand.u32 %s29, 1
          %s220 = smul.addr %s219, 64
          %s221 = scalar_lea.vmem [#allocation2], %s220
          %s223 = ssub.s32 1024, 1024
          %224 = vsyncadd %s218, %s223
          %s225 = smul.addr %s19, 8
          %s226 = smul.addr %s225, 128
          %s227 = scalar_lea.hbm %s0, %s226
          %s228 = sshll.u32 %s221, 4
          %s229 = int_to_ptr.vmem [resolvable:$true] %s228
          %234 = dma.hbm_to_vmem [thread:$0]  %s227, 1024, %s229, %s218, 128, 128, 8
        $region36: #{tpu_custom_call.1} parent=31 // pred_fallthru
          _
      $region32: #{tpu_custom_call.1} parent=5 // pred_fallthru
        _
      %p235 = scmp.le.s32.totalorder 1, %s19
      %p236 = scmp.lt.s32.totalorder %s19, 3
      %p237 = pnand %p235, %p236
      %p238 = pneg %p237
      // Predicated region
      $region37: #{tpu_custom_call.1} parent=5 // pred_check
        _
      $region38: #{tpu_custom_call.1} parent=5 // pred_check_branch
        %240 = sbr.rel (%p237) target = $region40
      $region39: #{tpu_custom_call.1} parent=5 // pred_region
        %s241 = ssub.s32 %s19, 1
        %s242 = sand.u32 %s32, 1
        %s243 = scalar_lea.sflag [#allocation3], %s242
        %s244 = sand.u32 %s32, 1
        %s245 = smul.addr %s244, 64
        %s246 = scalar_lea.vmem [#allocation2], %s245
        // Predicated region
        $region41: #{tpu_custom_call.1} parent=39 // pred_check
          %p247 = pneg %p45
        $region42: #{tpu_custom_call.1} parent=39 // pred_check_branch
          %249 = sbr.rel (%p247) target = $region44
        $region43: #{tpu_custom_call.1} parent=39 // pred_region
          %250 = dma.done %s243, 1024
        $region44: #{tpu_custom_call.1} parent=39 // pred_fallthru
          _
        // Predicated region
        $region45: #{tpu_custom_call.1} parent=39 // pred_check
          %p251 = pneg %p66
        $region46: #{tpu_custom_call.1} parent=39 // pred_check_branch
          %253 = sbr.rel (%p251) target = $region48
        $region47: #{tpu_custom_call.1} parent=39 // pred_region
          %254 = dma.done [#allocation6], 576
        $region48: #{tpu_custom_call.1} parent=39 // pred_fallthru
          _
        // Predicated region
        $region49: #{tpu_custom_call.1} parent=39 // pred_check
          %p255 = pneg %p87
        $region50: #{tpu_custom_call.1} parent=39 // pred_check_branch
          %257 = sbr.rel (%p255) target = $region52
        $region51: #{tpu_custom_call.1} parent=39 // pred_region
          %258 = dma.done [#allocation6], 64
        $region52: #{tpu_custom_call.1} parent=39 // pred_fallthru
          _
        // Predicated region
        $region53: #{tpu_custom_call.1} parent=39 // pred_check
          %p259 = pneg %p108
        $region54: #{tpu_custom_call.1} parent=39 // pred_check_branch
          %261 = sbr.rel (%p259) target = $region56
        $region55: #{tpu_custom_call.1} parent=39 // pred_region
          %262 = dma.done [#allocation9], 1536
        $region56: #{tpu_custom_call.1} parent=39 // pred_fallthru
          _
        %s263 = sand.u32 %s32, 1
        %s264 = scalar_lea.sflag [#allocation3], %s263
        %s265 = sand.u32 %s32, 1
        %s266 = smul.addr %s265, 64
        %s267 = scalar_lea.vmem [#allocation2], %s266
        %p268 = pneg %p45
        %p269 = pneg %p42
        %p270 = pneg %p66
        %p271 = pneg %p63
        %p272 = pneg %p87
        %p273 = pneg %p84
        %p274 = pneg %p108
        %p275 = pneg %p105
        %p276 = pneg %p129
        %p277 = pneg %p126
        %p278 = pneg %p155
        %p279 = pneg %p152
        %s280 = sand.u32 %s142, 1
        %s281 = scalar_lea.sflag [#allocation4], %s280
        %s282 = sand.u32 %s142, 1
        %s283 = smul.addr %s282, 64
        %s284 = scalar_lea.vmem [#allocation10], %s283
        %v285 = vld [vmem:[#allocation5] sm:$0x7]
        %v286 = vld [vmem:[#allocation5 + $0x4] sm:$0x7]
        %v287 = vld [vmem:[#allocation5 + $0x8] sm:$0x7]
        %v288 = vld [vmem:[#allocation5 + $0xc] sm:$0x7]
        %v289 = vld [vmem:[#allocation5 + $0x10] sm:$0x7]
        %v290 = vld [vmem:[#allocation5 + $0x14] sm:$0x7]
        %v291 = vld [vmem:[#allocation5 + $0x18] sm:$0x7]
        %v292 = vld [vmem:[#allocation5 + $0x1c] sm:$0x7]
        %v293 = vld [vmem:[#allocation5 + $0x20] sm:$0x7]
        %v294 = vld [vmem:[#allocation7] sm:$0x7]
        %v295 = vld [vmem:[%s4] sm:$0x1]
        %v296 = vlaneseq
        %v297 = vshrl.u32 %v296, 7
        %vm298 = vcmp.gt.s32.totalorder %v297, 0
        %v299 = vsel %vm298, 1, 0
        %v300 = vcvt.s32.f32 %v299
        %vm301 = vcmp.lt.s32.totalorder %v297, 7
        %v302 = vsel %vm301, 1, 0
        %v303 = vcvt.s32.f32 %v302
        %v304 = vld [vmem:[%s246] sm:$0xff]
        %v305 = vld [vmem:[%s246 + $0x8] sm:$0xff]
        %v306 = vld [vmem:[%s246 + $0x10] sm:$0xff]
        %v307 = vld [vmem:[%s246 + $0x18] sm:$0xff]
        %v308 = vld [vmem:[%s246 + $0x20] sm:$0xff]
        %v309 = vld [vmem:[%s246 + $0x28] sm:$0xff]
        %v310 = vld [vmem:[%s246 + $0x30] sm:$0xff]
        %v311 = vld [vmem:[%s246 + $0x38] sm:$0xff]
        %v312 = vrot.slane %v304, 7
        %v313 = vrot.slane %v305, 7
        %v314 = vrot.slane %v306, 7
        %v315 = vrot.slane %v307, 7
        %v316 = vrot.slane %v308, 7
        %v317 = vrot.slane %v309, 7
        %v318 = vrot.slane %v310, 7
        %v319 = vmul.f32 0.0, %v300
        %v320 = vmul.f32 %v312, %v300
        %v321 = vmul.f32 %v313, %v300
        %v322 = vmul.f32 %v314, %v300
        %v323 = vmul.f32 %v315, %v300
        %v324 = vmul.f32 %v316, %v300
        %v325 = vmul.f32 %v317, %v300
        %v326 = vmul.f32 %v318, %v300
        %v327 = vrot.slane %v304, 1
        %v328 = vrot.slane %v305, 1
        %v329 = vrot.slane %v306, 1
        %v330 = vrot.slane %v307, 1
        %v331 = vrot.slane %v308, 1
        %v332 = vrot.slane %v309, 1
        %v333 = vrot.slane %v310, 1
        %v334 = vmul.f32 0.0, %v303
        %v335 = vmul.f32 %v327, %v303
        %v336 = vmul.f32 %v328, %v303
        %v337 = vmul.f32 %v329, %v303
        %v338 = vmul.f32 %v330, %v303
        %v339 = vmul.f32 %v331, %v303
        %v340 = vmul.f32 %v332, %v303
        %v341 = vmul.f32 %v333, %v303
        %v342 = vlaneseq
        %v343 = vshrl.u32 %v342, 7
        %v344 = vsub.s32 0, %v343
        %v345 = vrot.slane %v285, %v344
        %v346 = vmul.f32 %v319, %v345
        %v347 = vmul.f32 %v320, %v345
        %v348 = vmul.f32 %v321, %v345
        %v349 = vmul.f32 %v322, %v345
        %v350 = vmul.f32 %v323, %v345
        %v351 = vmul.f32 %v324, %v345
        %v352 = vmul.f32 %v325, %v345
        %v353 = vmul.f32 %v326, %v345
        %v354 = vlaneseq
        %v355 = vshrl.u32 %v354, 7
        %v356 = vsub.s32 0, %v355
        %v357 = vrot.slane %v288, %v356
        %v358 = vmul.f32 %v319, %v357
        %v359 = vmul.f32 %v320, %v357
        %v360 = vmul.f32 %v321, %v357
        %v361 = vmul.f32 %v322, %v357
        %v362 = vmul.f32 %v323, %v357
        %v363 = vmul.f32 %v324, %v357
        %v364 = vmul.f32 %v325, %v357
        %v365 = vmul.f32 %v326, %v357
        %v366 = vlaneseq
        %v367 = vshrl.u32 %v366, 7
        %v368 = vsub.s32 0, %v367
        %v369 = vrot.slane %v291, %v368
        %v370 = vmul.f32 %v319, %v369
        %v371 = vmul.f32 %v320, %v369
        %v372 = vmul.f32 %v321, %v369
        %v373 = vmul.f32 %v322, %v369
        %v374 = vmul.f32 %v323, %v369
        %v375 = vmul.f32 %v324, %v369
        %v376 = vmul.f32 %v325, %v369
        %v377 = vmul.f32 %v326, %v369
        %v378 = vlaneseq
        %v379 = vshrl.u32 %v378, 7
        %v380 = vsub.s32 1, %v379
        %v381 = vrot.slane %v285, %v380
        %v382 = vmul.f32 %v381, 0.0
        %v383 = vmul.f32 %v304, %v381
        %v384 = vmul.f32 %v305, %v381
        %v385 = vmul.f32 %v306, %v381
        %v386 = vmul.f32 %v307, %v381
        %v387 = vmul.f32 %v308, %v381
        %v388 = vmul.f32 %v309, %v381
        %v389 = vmul.f32 %v310, %v381
        %v390 = vadd.f32 %v346, %v382
        %v391 = vadd.f32 %v347, %v383
        %v392 = vadd.f32 %v348, %v384
        %v393 = vadd.f32 %v349, %v385
        %v394 = vadd.f32 %v350, %v386
        %v395 = vadd.f32 %v351, %v387
        %v396 = vadd.f32 %v352, %v388
        %v397 = vadd.f32 %v353, %v389
        %v398 = vlaneseq
        %v399 = vshrl.u32 %v398, 7
        %v400 = vsub.s32 1, %v399
        %v401 = vrot.slane %v288, %v400
        %v402 = vmul.f32 %v401, 0.0
        %v403 = vmul.f32 %v304, %v401
        %v404 = vmul.f32 %v305, %v401
        %v405 = vmul.f32 %v306, %v401
        %v406 = vmul.f32 %v307, %v401
        %v407 = vmul.f32 %v308, %v401
        %v408 = vmul.f32 %v309, %v401
        %v409 = vmul.f32 %v310, %v401
        %v410 = vadd.f32 %v358, %v402
        %v411 = vadd.f32 %v359, %v403
        %v412 = vadd.f32 %v360, %v404
        %v413 = vadd.f32 %v361, %v405
        %v414 = vadd.f32 %v362, %v406
        %v415 = vadd.f32 %v363, %v407
        %v416 = vadd.f32 %v364, %v408
        %v417 = vadd.f32 %v365, %v409
        %v418 = vlaneseq
        %v419 = vshrl.u32 %v418, 7
        %v420 = vsub.s32 1, %v419
        %v421 = vrot.slane %v291, %v420
        %v422 = vmul.f32 %v421, 0.0
        %v423 = vmul.f32 %v304, %v421
        %v424 = vmul.f32 %v305, %v421
        %v425 = vmul.f32 %v306, %v421
        %v426 = vmul.f32 %v307, %v421
        %v427 = vmul.f32 %v308, %v421
        %v428 = vmul.f32 %v309, %v421
        %v429 = vmul.f32 %v310, %v421
        %v430 = vadd.f32 %v370, %v422
        %v431 = vadd.f32 %v371, %v423
        %v432 = vadd.f32 %v372, %v424
        %v433 = vadd.f32 %v373, %v425
        %v434 = vadd.f32 %v374, %v426
        %v435 = vadd.f32 %v375, %v427
        %v436 = vadd.f32 %v376, %v428
        %v437 = vadd.f32 %v377, %v429
        %v438 = vlaneseq
        %v439 = vshrl.u32 %v438, 7
        %v440 = vsub.s32 2, %v439
        %v441 = vrot.slane %v285, %v440
        %v442 = vmul.f32 %v334, %v441
        %v443 = vmul.f32 %v335, %v441
        %v444 = vmul.f32 %v336, %v441
        %v445 = vmul.f32 %v337, %v441
        %v446 = vmul.f32 %v338, %v441
        %v447 = vmul.f32 %v339, %v441
        %v448 = vmul.f32 %v340, %v441
        %v449 = vmul.f32 %v341, %v441
        %v450 = vadd.f32 %v390, %v442
        %v451 = vadd.f32 %v391, %v443
        %v452 = vadd.f32 %v392, %v444
        %v453 = vadd.f32 %v393, %v445
        %v454 = vadd.f32 %v394, %v446
        %v455 = vadd.f32 %v395, %v447
        %v456 = vadd.f32 %v396, %v448
        %v457 = vadd.f32 %v397, %v449
        %v458 = vlaneseq
        %v459 = vshrl.u32 %v458, 7
        %v460 = vsub.s32 2, %v459
        %v461 = vrot.slane %v288, %v460
        %v462 = vmul.f32 %v334, %v461
        %v463 = vmul.f32 %v335, %v461
        %v464 = vmul.f32 %v336, %v461
        %v465 = vmul.f32 %v337, %v461
        %v466 = vmul.f32 %v338, %v461
        %v467 = vmul.f32 %v339, %v461
        %v468 = vmul.f32 %v340, %v461
        %v469 = vmul.f32 %v341, %v461
        %v470 = vadd.f32 %v410, %v462
        %v471 = vadd.f32 %v411, %v463
        %v472 = vadd.f32 %v412, %v464
        %v473 = vadd.f32 %v413, %v465
        %v474 = vadd.f32 %v414, %v466
        %v475 = vadd.f32 %v415, %v467
        %v476 = vadd.f32 %v416, %v468
        %v477 = vadd.f32 %v417, %v469
        %v478 = vlaneseq
        %v479 = vshrl.u32 %v478, 7
        %v480 = vsub.s32 2, %v479
        %v481 = vrot.slane %v291, %v480
        %v482 = vmul.f32 %v334, %v481
        %v483 = vmul.f32 %v335, %v481
        %v484 = vmul.f32 %v336, %v481
        %v485 = vmul.f32 %v337, %v481
        %v486 = vmul.f32 %v338, %v481
        %v487 = vmul.f32 %v339, %v481
        %v488 = vmul.f32 %v340, %v481
        %v489 = vmul.f32 %v341, %v481
        %v490 = vadd.f32 %v430, %v482
        %v491 = vadd.f32 %v431, %v483
        %v492 = vadd.f32 %v432, %v484
        %v493 = vadd.f32 %v433, %v485
        %v494 = vadd.f32 %v434, %v486
        %v495 = vadd.f32 %v435, %v487
        %v496 = vadd.f32 %v436, %v488
        %v497 = vadd.f32 %v437, %v489
        %v498 = vrot.slane %v311, 7
        %v499 = vmul.f32 %v498, %v300
        %v500 = vrot.slane %v311, 1
        %v501 = vmul.f32 %v500, %v303
        %v502 = vlaneseq
        %v503 = vshrl.u32 %v502, 7
        %v504 = vsub.s32 0, %v503
        %v505 = vrot.slane %v286, %v504
        %v506 = vmul.f32 %v320, %v505
        %v507 = vmul.f32 %v321, %v505
        %v508 = vmul.f32 %v322, %v505
        %v509 = vmul.f32 %v323, %v505
        %v510 = vmul.f32 %v324, %v505
        %v511 = vmul.f32 %v325, %v505
        %v512 = vmul.f32 %v326, %v505
        %v513 = vmul.f32 %v499, %v505
        %v514 = vadd.f32 %v450, %v506
        %v515 = vadd.f32 %v451, %v507
        %v516 = vadd.f32 %v452, %v508
        %v517 = vadd.f32 %v453, %v509
        %v518 = vadd.f32 %v454, %v510
        %v519 = vadd.f32 %v455, %v511
        %v520 = vadd.f32 %v456, %v512
        %v521 = vadd.f32 %v457, %v513
        %v522 = vlaneseq
        %v523 = vshrl.u32 %v522, 7
        %v524 = vsub.s32 0, %v523
        %v525 = vrot.slane %v289, %v524
        %v526 = vmul.f32 %v320, %v525
        %v527 = vmul.f32 %v321, %v525
        %v528 = vmul.f32 %v322, %v525
        %v529 = vmul.f32 %v323, %v525
        %v530 = vmul.f32 %v324, %v525
        %v531 = vmul.f32 %v325, %v525
        %v532 = vmul.f32 %v326, %v525
        %v533 = vmul.f32 %v499, %v525
        %v534 = vadd.f32 %v470, %v526
        %v535 = vadd.f32 %v471, %v527
        %v536 = vadd.f32 %v472, %v528
        %v537 = vadd.f32 %v473, %v529
        %v538 = vadd.f32 %v474, %v530
        %v539 = vadd.f32 %v475, %v531
        %v540 = vadd.f32 %v476, %v532
        %v541 = vadd.f32 %v477, %v533
        %v542 = vlaneseq
        %v543 = vshrl.u32 %v542, 7
        %v544 = vsub.s32 0, %v543
        %v545 = vrot.slane %v292, %v544
        %v546 = vmul.f32 %v320, %v545
        %v547 = vmul.f32 %v321, %v545
        %v548 = vmul.f32 %v322, %v545
        %v549 = vmul.f32 %v323, %v545
        %v550 = vmul.f32 %v324, %v545
        %v551 = vmul.f32 %v325, %v545
        %v552 = vmul.f32 %v326, %v545
        %v553 = vmul.f32 %v499, %v545
        %v554 = vadd.f32 %v490, %v546
        %v555 = vadd.f32 %v491, %v547
        %v556 = vadd.f32 %v492, %v548
        %v557 = vadd.f32 %v493, %v549
        %v558 = vadd.f32 %v494, %v550
        %v559 = vadd.f32 %v495, %v551
        %v560 = vadd.f32 %v496, %v552
        %v561 = vadd.f32 %v497, %v553
        %v562 = vlaneseq
        %v563 = vshrl.u32 %v562, 7
        %v564 = vsub.s32 1, %v563
        %v565 = vrot.slane %v286, %v564
        %v566 = vmul.f32 %v304, %v565
        %v567 = vmul.f32 %v305, %v565
        %v568 = vmul.f32 %v306, %v565
        %v569 = vmul.f32 %v307, %v565
        %v570 = vmul.f32 %v308, %v565
        %v571 = vmul.f32 %v309, %v565
        %v572 = vmul.f32 %v310, %v565
        %v573 = vmul.f32 %v311, %v565
        %v574 = vadd.f32 %v514, %v566
        %v575 = vadd.f32 %v515, %v567
        %v576 = vadd.f32 %v516, %v568
        %v577 = vadd.f32 %v517, %v569
        %v578 = vadd.f32 %v518, %v570
        %v579 = vadd.f32 %v519, %v571
        %v580 = vadd.f32 %v520, %v572
        %v581 = vadd.f32 %v521, %v573
        %v582 = vlaneseq
        %v583 = vshrl.u32 %v582, 7
        %v584 = vsub.s32 1, %v583
        %v585 = vrot.slane %v289, %v584
        %v586 = vmul.f32 %v304, %v585
        %v587 = vmul.f32 %v305, %v585
        %v588 = vmul.f32 %v306, %v585
        %v589 = vmul.f32 %v307, %v585
        %v590 = vmul.f32 %v308, %v585
        %v591 = vmul.f32 %v309, %v585
        %v592 = vmul.f32 %v310, %v585
        %v593 = vmul.f32 %v311, %v585
        %v594 = vadd.f32 %v534, %v586
        %v595 = vadd.f32 %v535, %v587
        %v596 = vadd.f32 %v536, %v588
        %v597 = vadd.f32 %v537, %v589
        %v598 = vadd.f32 %v538, %v590
        %v599 = vadd.f32 %v539, %v591
        %v600 = vadd.f32 %v540, %v592
        %v601 = vadd.f32 %v541, %v593
        %v602 = vlaneseq
        %v603 = vshrl.u32 %v602, 7
        %v604 = vsub.s32 1, %v603
        %v605 = vrot.slane %v292, %v604
        %v606 = vmul.f32 %v304, %v605
        %v607 = vmul.f32 %v305, %v605
        %v608 = vmul.f32 %v306, %v605
        %v609 = vmul.f32 %v307, %v605
        %v610 = vmul.f32 %v308, %v605
        %v611 = vmul.f32 %v309, %v605
        %v612 = vmul.f32 %v310, %v605
        %v613 = vmul.f32 %v311, %v605
        %v614 = vadd.f32 %v554, %v606
        %v615 = vadd.f32 %v555, %v607
        %v616 = vadd.f32 %v556, %v608
        %v617 = vadd.f32 %v557, %v609
        %v618 = vadd.f32 %v558, %v610
        %v619 = vadd.f32 %v559, %v611
        %v620 = vadd.f32 %v560, %v612
        %v621 = vadd.f32 %v561, %v613
        %v622 = vlaneseq
        %v623 = vshrl.u32 %v622, 7
        %v624 = vsub.s32 2, %v623
        %v625 = vrot.slane %v286, %v624
        %v626 = vmul.f32 %v335, %v625
        %v627 = vmul.f32 %v336, %v625
        %v628 = vmul.f32 %v337, %v625
        %v629 = vmul.f32 %v338, %v625
        %v630 = vmul.f32 %v339, %v625
        %v631 = vmul.f32 %v340, %v625
        %v632 = vmul.f32 %v341, %v625
        %v633 = vmul.f32 %v501, %v625
        %v634 = vadd.f32 %v574, %v626
        %v635 = vadd.f32 %v575, %v627
        %v636 = vadd.f32 %v576, %v628
        %v637 = vadd.f32 %v577, %v629
        %v638 = vadd.f32 %v578, %v630
        %v639 = vadd.f32 %v579, %v631
        %v640 = vadd.f32 %v580, %v632
        %v641 = vadd.f32 %v581, %v633
        %v642 = vlaneseq
        %v643 = vshrl.u32 %v642, 7
        %v644 = vsub.s32 2, %v643
        %v645 = vrot.slane %v289, %v644
        %v646 = vmul.f32 %v335, %v645
        %v647 = vmul.f32 %v336, %v645
        %v648 = vmul.f32 %v337, %v645
        %v649 = vmul.f32 %v338, %v645
        %v650 = vmul.f32 %v339, %v645
        %v651 = vmul.f32 %v340, %v645
        %v652 = vmul.f32 %v341, %v645
        %v653 = vmul.f32 %v501, %v645
        %v654 = vadd.f32 %v594, %v646
        %v655 = vadd.f32 %v595, %v647
        %v656 = vadd.f32 %v596, %v648
        %v657 = vadd.f32 %v597, %v649
        %v658 = vadd.f32 %v598, %v650
        %v659 = vadd.f32 %v599, %v651
        %v660 = vadd.f32 %v600, %v652
        %v661 = vadd.f32 %v601, %v653
        %v662 = vlaneseq
        %v663 = vshrl.u32 %v662, 7
        %v664 = vsub.s32 2, %v663
        %v665 = vrot.slane %v292, %v664
        %v666 = vmul.f32 %v335, %v665
        %v667 = vmul.f32 %v336, %v665
        %v668 = vmul.f32 %v337, %v665
        %v669 = vmul.f32 %v338, %v665
        %v670 = vmul.f32 %v339, %v665
        %v671 = vmul.f32 %v340, %v665
        %v672 = vmul.f32 %v341, %v665
        %v673 = vmul.f32 %v501, %v665
        %v674 = vadd.f32 %v614, %v666
        %v675 = vadd.f32 %v615, %v667
        %v676 = vadd.f32 %v616, %v668
        %v677 = vadd.f32 %v617, %v669
        %v678 = vadd.f32 %v618, %v670
        %v679 = vadd.f32 %v619, %v671
        %v680 = vadd.f32 %v620, %v672
        %v681 = vadd.f32 %v621, %v673
        %v682 = vlaneseq
        %v683 = vshrl.u32 %v682, 7
        %v684 = vsub.s32 0, %v683
        %v685 = vrot.slane %v287, %v684
        %v686 = vmul.f32 %v321, %v685
        %v687 = vmul.f32 %v322, %v685
        %v688 = vmul.f32 %v323, %v685
        %v689 = vmul.f32 %v324, %v685
        %v690 = vmul.f32 %v325, %v685
        %v691 = vmul.f32 %v326, %v685
        %v692 = vmul.f32 %v499, %v685
        %v693 = vmul.f32 %v319, %v685
        %v694 = vadd.f32 %v634, %v686
        %v695 = vadd.f32 %v635, %v687
        %v696 = vadd.f32 %v636, %v688
        %v697 = vadd.f32 %v637, %v689
        %v698 = vadd.f32 %v638, %v690
        %v699 = vadd.f32 %v639, %v691
        %v700 = vadd.f32 %v640, %v692
        %v701 = vadd.f32 %v641, %v693
        %v702 = vlaneseq
        %v703 = vshrl.u32 %v702, 7
        %v704 = vsub.s32 0, %v703
        %v705 = vrot.slane %v290, %v704
        %v706 = vmul.f32 %v321, %v705
        %v707 = vmul.f32 %v322, %v705
        %v708 = vmul.f32 %v323, %v705
        %v709 = vmul.f32 %v324, %v705
        %v710 = vmul.f32 %v325, %v705
        %v711 = vmul.f32 %v326, %v705
        %v712 = vmul.f32 %v499, %v705
        %v713 = vmul.f32 %v319, %v705
        %v714 = vadd.f32 %v654, %v706
        %v715 = vadd.f32 %v655, %v707
        %v716 = vadd.f32 %v656, %v708
        %v717 = vadd.f32 %v657, %v709
        %v718 = vadd.f32 %v658, %v710
        %v719 = vadd.f32 %v659, %v711
        %v720 = vadd.f32 %v660, %v712
        %v721 = vadd.f32 %v661, %v713
        %v722 = vlaneseq
        %v723 = vshrl.u32 %v722, 7
        %v724 = vsub.s32 0, %v723
        %v725 = vrot.slane %v293, %v724
        %v726 = vmul.f32 %v321, %v725
        %v727 = vmul.f32 %v322, %v725
        %v728 = vmul.f32 %v323, %v725
        %v729 = vmul.f32 %v324, %v725
        %v730 = vmul.f32 %v325, %v725
        %v731 = vmul.f32 %v326, %v725
        %v732 = vmul.f32 %v499, %v725
        %v733 = vmul.f32 %v319, %v725
        %v734 = vadd.f32 %v674, %v726
        %v735 = vadd.f32 %v675, %v727
        %v736 = vadd.f32 %v676, %v728
        %v737 = vadd.f32 %v677, %v729
        %v738 = vadd.f32 %v678, %v730
        %v739 = vadd.f32 %v679, %v731
        %v740 = vadd.f32 %v680, %v732
        %v741 = vadd.f32 %v681, %v733
        %v742 = vlaneseq
        %v743 = vshrl.u32 %v742, 7
        %v744 = vsub.s32 1, %v743
        %v745 = vrot.slane %v287, %v744
        %v746 = vmul.f32 %v305, %v745
        %v747 = vmul.f32 %v306, %v745
        %v748 = vmul.f32 %v307, %v745
        %v749 = vmul.f32 %v308, %v745
        %v750 = vmul.f32 %v309, %v745
        %v751 = vmul.f32 %v310, %v745
        %v752 = vmul.f32 %v311, %v745
        %v753 = vmul.f32 %v745, 0.0
        %v754 = vadd.f32 %v694, %v746
        %v755 = vadd.f32 %v695, %v747
        %v756 = vadd.f32 %v696, %v748
        %v757 = vadd.f32 %v697, %v749
        %v758 = vadd.f32 %v698, %v750
        %v759 = vadd.f32 %v699, %v751
        %v760 = vadd.f32 %v700, %v752
        %v761 = vadd.f32 %v701, %v753
        %v762 = vlaneseq
        %v763 = vshrl.u32 %v762, 7
        %v764 = vsub.s32 1, %v763
        %v765 = vrot.slane %v290, %v764
        %v766 = vmul.f32 %v305, %v765
        %v767 = vmul.f32 %v306, %v765
        %v768 = vmul.f32 %v307, %v765
        %v769 = vmul.f32 %v308, %v765
        %v770 = vmul.f32 %v309, %v765
        %v771 = vmul.f32 %v310, %v765
        %v772 = vmul.f32 %v311, %v765
        %v773 = vmul.f32 %v765, 0.0
        %v774 = vadd.f32 %v714, %v766
        %v775 = vadd.f32 %v715, %v767
        %v776 = vadd.f32 %v716, %v768
        %v777 = vadd.f32 %v717, %v769
        %v778 = vadd.f32 %v718, %v770
        %v779 = vadd.f32 %v719, %v771
        %v780 = vadd.f32 %v720, %v772
        %v781 = vadd.f32 %v721, %v773
        %v782 = vlaneseq
        %v783 = vshrl.u32 %v782, 7
        %v784 = vsub.s32 1, %v783
        %v785 = vrot.slane %v293, %v784
        %v786 = vmul.f32 %v305, %v785
        %v787 = vmul.f32 %v306, %v785
        %v788 = vmul.f32 %v307, %v785
        %v789 = vmul.f32 %v308, %v785
        %v790 = vmul.f32 %v309, %v785
        %v791 = vmul.f32 %v310, %v785
        %v792 = vmul.f32 %v311, %v785
        %v793 = vmul.f32 %v785, 0.0
        %v794 = vadd.f32 %v734, %v786
        %v795 = vadd.f32 %v735, %v787
        %v796 = vadd.f32 %v736, %v788
        %v797 = vadd.f32 %v737, %v789
        %v798 = vadd.f32 %v738, %v790
        %v799 = vadd.f32 %v739, %v791
        %v800 = vadd.f32 %v740, %v792
        %v801 = vadd.f32 %v741, %v793
        %v802 = vlaneseq
        %v803 = vshrl.u32 %v802, 7
        %v804 = vsub.s32 2, %v803
        %v805 = vrot.slane %v287, %v804
        %v806 = vmul.f32 %v336, %v805
        %v807 = vmul.f32 %v337, %v805
        %v808 = vmul.f32 %v338, %v805
        %v809 = vmul.f32 %v339, %v805
        %v810 = vmul.f32 %v340, %v805
        %v811 = vmul.f32 %v341, %v805
        %v812 = vmul.f32 %v501, %v805
        %v813 = vmul.f32 %v334, %v805
        %v814 = vadd.f32 %v754, %v806
        %v815 = vadd.f32 %v755, %v807
        %v816 = vadd.f32 %v756, %v808
        %v817 = vadd.f32 %v757, %v809
        %v818 = vadd.f32 %v758, %v810
        %v819 = vadd.f32 %v759, %v811
        %v820 = vadd.f32 %v760, %v812
        %v821 = vadd.f32 %v761, %v813
        %v822 = vlaneseq
        %v823 = vshrl.u32 %v822, 7
        %v824 = vsub.s32 2, %v823
        %v825 = vrot.slane %v290, %v824
        %v826 = vmul.f32 %v336, %v825
        %v827 = vmul.f32 %v337, %v825
        %v828 = vmul.f32 %v338, %v825
        %v829 = vmul.f32 %v339, %v825
        %v830 = vmul.f32 %v340, %v825
        %v831 = vmul.f32 %v341, %v825
        %v832 = vmul.f32 %v501, %v825
        %v833 = vmul.f32 %v334, %v825
        %v834 = vadd.f32 %v774, %v826
        %v835 = vadd.f32 %v775, %v827
        %v836 = vadd.f32 %v776, %v828
        %v837 = vadd.f32 %v777, %v829
        %v838 = vadd.f32 %v778, %v830
        %v839 = vadd.f32 %v779, %v831
        %v840 = vadd.f32 %v780, %v832
        %v841 = vadd.f32 %v781, %v833
        %v842 = vlaneseq
        %v843 = vshrl.u32 %v842, 7
        %v844 = vsub.s32 2, %v843
        %v845 = vrot.slane %v293, %v844
        %v846 = vmul.f32 %v336, %v845
        %v847 = vmul.f32 %v337, %v845
        %v848 = vmul.f32 %v338, %v845
        %v849 = vmul.f32 %v339, %v845
        %v850 = vmul.f32 %v340, %v845
        %v851 = vmul.f32 %v341, %v845
        %v852 = vmul.f32 %v501, %v845
        %v853 = vmul.f32 %v334, %v845
        %v854 = vadd.f32 %v794, %v846
        %v855 = vadd.f32 %v795, %v847
        %v856 = vadd.f32 %v796, %v848
        %v857 = vadd.f32 %v797, %v849
        %v858 = vadd.f32 %v798, %v850
        %v859 = vadd.f32 %v799, %v851
        %v860 = vadd.f32 %v800, %v852
        %v861 = vadd.f32 %v801, %v853
        %v862 = vlaneseq
        %v863 = vshrl.u32 %v862, 7
        %v864 = vsub.s32 0, %v863
        %v865 = vrot.slane %v294, %v864
        %v866 = vadd.f32 %v814, %v865
        %v867 = vadd.f32 %v815, %v865
        %v868 = vadd.f32 %v816, %v865
        %v869 = vadd.f32 %v817, %v865
        %v870 = vadd.f32 %v818, %v865
        %v871 = vadd.f32 %v819, %v865
        %v872 = vadd.f32 %v820, %v865
        %v873 = vadd.f32 %v821, %v865
        %v874 = vmax.f32 %v866, 0.0
        %v875 = vmax.f32 %v867, 0.0
        %v876 = vmax.f32 %v868, 0.0
        %v877 = vmax.f32 %v869, 0.0
        %v878 = vmax.f32 %v870, 0.0
        %v879 = vmax.f32 %v871, 0.0
        %v880 = vmax.f32 %v872, 0.0
        %v881 = vmax.f32 %v873, 0.0
        %v882 = vlaneseq
        %v883 = vshrl.u32 %v882, 7
        %v884 = vsub.s32 1, %v883
        %v885 = vrot.slane %v294, %v884
        %v886 = vadd.f32 %v834, %v885
        %v887 = vadd.f32 %v835, %v885
        %v888 = vadd.f32 %v836, %v885
        %v889 = vadd.f32 %v837, %v885
        %v890 = vadd.f32 %v838, %v885
        %v891 = vadd.f32 %v839, %v885
        %v892 = vadd.f32 %v840, %v885
        %v893 = vadd.f32 %v841, %v885
        %v894 = vmax.f32 %v886, 0.0
        %v895 = vmax.f32 %v887, 0.0
        %v896 = vmax.f32 %v888, 0.0
        %v897 = vmax.f32 %v889, 0.0
        %v898 = vmax.f32 %v890, 0.0
        %v899 = vmax.f32 %v891, 0.0
        %v900 = vmax.f32 %v892, 0.0
        %v901 = vmax.f32 %v893, 0.0
        %v902 = vlaneseq
        %v903 = vshrl.u32 %v902, 7
        %v904 = vsub.s32 2, %v903
        %v905 = vrot.slane %v294, %v904
        %v906 = vadd.f32 %v854, %v905
        %v907 = vadd.f32 %v855, %v905
        %v908 = vadd.f32 %v856, %v905
        %v909 = vadd.f32 %v857, %v905
        %v910 = vadd.f32 %v858, %v905
        %v911 = vadd.f32 %v859, %v905
        %v912 = vadd.f32 %v860, %v905
        %v913 = vadd.f32 %v861, %v905
        %v914 = vmax.f32 %v906, 0.0
        %v915 = vmax.f32 %v907, 0.0
        %v916 = vmax.f32 %v908, 0.0
        %v917 = vmax.f32 %v909, 0.0
        %v918 = vmax.f32 %v910, 0.0
        %v919 = vmax.f32 %v911, 0.0
        %v920 = vmax.f32 %v912, 0.0
        %v921 = vmax.f32 %v913, 0.0
        %v922 = vld [vmem:[#allocation8] sm:$0xff]
        %v923 = vld [vmem:[#allocation8 + $0x8] sm:$0xff]
        %v924 = vld [vmem:[#allocation8 + $0x10] sm:$0xff]
        %v925 = vld [vmem:[#allocation8 + $0x18] sm:$0xff]
        %vm926 = vcmask 261120
        %v928 = vsel %vm926, %v874, 0
        %v931 = vsel %vm926, %v875, 0
        %v934 = vsel %vm926, %v876, 0
        %v937 = vsel %vm926, %v877, 0
        %v940 = vsel %vm926, %v878, 0
        %v943 = vsel %vm926, %v879, 0
        %v946 = vsel %vm926, %v880, 0
        %v949 = vsel %vm926, %v881, 0
        %951 = vmatprep.subr.mxu0 0.0
        %952 = vmatpush1.msra.mxu0 0.0
        %953 = vmatprep.subr.mxu0 0.0
        %954 = vmatpush1.msra.mxu0 0.0
        %955 = vmatprep.subr.mxu0 0.0
        %956 = vmatpush1.msra.mxu0 0.0
        %957 = vmatprep.subr.mxu0 0.0
        %958 = vmatpush1.msra.mxu0 0.0
        %959 = vmatprep.subr.mxu0 0.0
        %960 = vmatpush1.msra.mxu0 0.0
        %961 = vmatprep.subr.mxu0 0.0
        %962 = vmatpush1.msra.mxu0 0.0
        %963 = vmatprep.subr.mxu0 0.0
        %964 = vmatpush1.msra.mxu0 0.0
        %965 = vmatprep.subr.mxu0 0.0
        %966 = vmatpush1.msra.mxu0 0.0
        %967 = vmatprep.subr.mxu0 0.0
        %968 = vmatpush1.msra.mxu0 0.0
        %969 = vmatprep.subr.mxu0 0.0
        %970 = vmatpush1.msra.mxu0 0.0
        %971 = vmatprep.subr.mxu0 0.0
        %972 = vmatpush1.msra.mxu0 0.0
        %973 = vmatprep.subr.mxu0 0.0
        %974 = vmatpush1.msra.mxu0 0.0
        %975 = vmatprep.subr.mxu0 0.0
        %976 = vmatpush1.msra.mxu0 %v925
        %977 = vmatprep.subr.mxu0 0.0
        %978 = vmatpush1.msra.mxu0 %v924
        %979 = vmatprep.subr.mxu0 0.0
        %980 = vmatpush1.msra.mxu0 %v923
        %981 = vmatprep.subr.mxu0 0.0
        %982 = vmatpush1.msra.mxu0 %v922
        %983 = vmatprep.subr.mxu0 0.0
        %984 = vmatpush2.msra.mxu0 0.0
        %985 = vmatprep.subr.mxu0 0.0
        %986 = vmatpush2.msra.mxu0 0.0
        %987 = vmatprep.subr.mxu0 0.0
        %988 = vmatpush2.msra.mxu0 0.0
        %989 = vmatprep.subr.mxu0 0.0
        %990 = vmatpush2.msra.mxu0 0.0
        %991 = vmatprep.subr.mxu0 0.0
        %992 = vmatpush2.msra.mxu0 0.0
        %993 = vmatprep.subr.mxu0 0.0
        %994 = vmatpush2.msra.mxu0 0.0
        %995 = vmatprep.subr.mxu0 0.0
        %996 = vmatpush2.msra.mxu0 0.0
        %997 = vmatprep.subr.mxu0 0.0
        %998 = vmatpush2.msra.mxu0 0.0
        %999 = vmatprep.subr.mxu0 0.0
        %1000 = vmatpush2.msra.mxu0 0.0
        %1001 = vmatprep.subr.mxu0 0.0
        %1002 = vmatpush2.msra.mxu0 0.0
        %1003 = vmatprep.subr.mxu0 0.0
        %1004 = vmatpush2.msra.mxu0 0.0
        %1005 = vmatprep.subr.mxu0 0.0
        %1006 = vmatpush2.msra.mxu0 0.0
        %1007 = vmatprep.subr.mxu0 0.0
        %1008 = vmatpush2.msra.mxu0 0.0
        %1009 = vmatprep.subr.mxu0 0.0
        %1010 = vmatpush2.msra.mxu0 0.0
        %1011 = vmatprep.subr.mxu0 0.0
        %1012 = vmatpush2.msra.mxu0 0.0
        %1013 = vmatprep.subr.mxu0 0.0
        %1014 = vmatpush2.msra.mxu0 0.0
        %1015 = vmatprep.mubr.f32.mxu0 0.0
        %1016 = vmatmul.mubr.f32.gmra.mxu0 %v928
        %v1017 = vpop.f32.mrf.mxu0
        %v1018 = vadd.f32 0.0, %v1017
        %v1019 = vpop.f32.mrf.mxu0
        %1020 = vmatprep.mubr.f32.mxu0 0.0
        %1021 = vmatmul.mubr.f32.gmra.mxu0 %v931
        %v1022 = vpop.f32.mrf.mxu0
        %v1023 = vadd.f32 0.0, %v1022
        %v1024 = vpop.f32.mrf.mxu0
        %1025 = vmatprep.mubr.f32.mxu0 0.0
        %1026 = vmatmul.mubr.f32.gmra.mxu0 %v934
        %v1027 = vpop.f32.mrf.mxu0
        %v1028 = vadd.f32 0.0, %v1027
        %v1029 = vpop.f32.mrf.mxu0
        %1030 = vmatprep.mubr.f32.mxu0 0.0
        %1031 = vmatmul.mubr.f32.gmra.mxu0 %v937
        %v1032 = vpop.f32.mrf.mxu0
        %v1033 = vadd.f32 0.0, %v1032
        %v1034 = vpop.f32.mrf.mxu0
        %1035 = vmatprep.mubr.f32.mxu0 0.0
        %1036 = vmatmul.mubr.f32.gmra.mxu0 %v940
        %v1037 = vpop.f32.mrf.mxu0
        %v1038 = vadd.f32 0.0, %v1037
        %v1039 = vpop.f32.mrf.mxu0
        %1040 = vmatprep.mubr.f32.mxu0 0.0
        %1041 = vmatmul.mubr.f32.gmra.mxu0 %v943
        %v1042 = vpop.f32.mrf.mxu0
        %v1043 = vadd.f32 0.0, %v1042
        %v1044 = vpop.f32.mrf.mxu0
        %1045 = vmatprep.mubr.f32.mxu0 0.0
        %1046 = vmatmul.mubr.f32.gmra.mxu0 %v946
        %v1047 = vpop.f32.mrf.mxu0
        %v1048 = vadd.f32 0.0, %v1047
        %v1049 = vpop.f32.mrf.mxu0
        %1050 = vmatprep.mubr.f32.mxu0 0.0
        %1051 = vmatmul.mubr.f32.gmra.mxu0 %v949
        %v1052 = vpop.f32.mrf.mxu0
        %v1053 = vadd.f32 0.0, %v1052
        %v1054 = vpop.f32.mrf.mxu0
        %1055 = vdwg.mxu0
        %s1056 = scalar_lea.vmem [#allocation8], 32
        %v1057 = vld [vmem:[%s1056] sm:$0xff]
        %v1058 = vld [vmem:[%s1056 + $0x8] sm:$0xff]
        %v1059 = vld [vmem:[%s1056 + $0x10] sm:$0xff]
        %v1060 = vld [vmem:[%s1056 + $0x18] sm:$0xff]
        %v1062 = vsel %vm926, %v894, 0
        %v1065 = vsel %vm926, %v895, 0
        %v1068 = vsel %vm926, %v896, 0
        %v1071 = vsel %vm926, %v897, 0
        %v1074 = vsel %vm926, %v898, 0
        %v1077 = vsel %vm926, %v899, 0
        %v1080 = vsel %vm926, %v900, 0
        %v1083 = vsel %vm926, %v901, 0
        %1085 = vmatprep.subr.mxu0 0.0
        %1086 = vmatpush1.msra.mxu0 0.0
        %1087 = vmatprep.subr.mxu0 0.0
        %1088 = vmatpush1.msra.mxu0 0.0
        %1089 = vmatprep.subr.mxu0 0.0
        %1090 = vmatpush1.msra.mxu0 0.0
        %1091 = vmatprep.subr.mxu0 0.0
        %1092 = vmatpush1.msra.mxu0 0.0
        %1093 = vmatprep.subr.mxu0 0.0
        %1094 = vmatpush1.msra.mxu0 0.0
        %1095 = vmatprep.subr.mxu0 0.0
        %1096 = vmatpush1.msra.mxu0 0.0
        %1097 = vmatprep.subr.mxu0 0.0
        %1098 = vmatpush1.msra.mxu0 0.0
        %1099 = vmatprep.subr.mxu0 0.0
        %1100 = vmatpush1.msra.mxu0 0.0
        %1101 = vmatprep.subr.mxu0 0.0
        %1102 = vmatpush1.msra.mxu0 0.0
        %1103 = vmatprep.subr.mxu0 0.0
        %1104 = vmatpush1.msra.mxu0 0.0
        %1105 = vmatprep.subr.mxu0 0.0
        %1106 = vmatpush1.msra.mxu0 0.0
        %1107 = vmatprep.subr.mxu0 0.0
        %1108 = vmatpush1.msra.mxu0 0.0
        %1109 = vmatprep.subr.mxu0 0.0
        %1110 = vmatpush1.msra.mxu0 %v1060
        %1111 = vmatprep.subr.mxu0 0.0
        %1112 = vmatpush1.msra.mxu0 %v1059
        %1113 = vmatprep.subr.mxu0 0.0
        %1114 = vmatpush1.msra.mxu0 %v1058
        %1115 = vmatprep.subr.mxu0 0.0
        %1116 = vmatpush1.msra.mxu0 %v1057
        %1117 = vmatprep.subr.mxu0 0.0
        %1118 = vmatpush2.msra.mxu0 0.0
        %1119 = vmatprep.subr.mxu0 0.0
        %1120 = vmatpush2.msra.mxu0 0.0
        %1121 = vmatprep.subr.mxu0 0.0
        %1122 = vmatpush2.msra.mxu0 0.0
        %1123 = vmatprep.subr.mxu0 0.0
        %1124 = vmatpush2.msra.mxu0 0.0
        %1125 = vmatprep.subr.mxu0 0.0
        %1126 = vmatpush2.msra.mxu0 0.0
        %1127 = vmatprep.subr.mxu0 0.0
        %1128 = vmatpush2.msra.mxu0 0.0
        %1129 = vmatprep.subr.mxu0 0.0
        %1130 = vmatpush2.msra.mxu0 0.0
        %1131 = vmatprep.subr.mxu0 0.0
        %1132 = vmatpush2.msra.mxu0 0.0
        %1133 = vmatprep.subr.mxu0 0.0
        %1134 = vmatpush2.msra.mxu0 0.0
        %1135 = vmatprep.subr.mxu0 0.0
        %1136 = vmatpush2.msra.mxu0 0.0
        %1137 = vmatprep.subr.mxu0 0.0
        %1138 = vmatpush2.msra.mxu0 0.0
        %1139 = vmatprep.subr.mxu0 0.0
        %1140 = vmatpush2.msra.mxu0 0.0
        %1141 = vmatprep.subr.mxu0 0.0
        %1142 = vmatpush2.msra.mxu0 0.0
        %1143 = vmatprep.subr.mxu0 0.0
        %1144 = vmatpush2.msra.mxu0 0.0
        %1145 = vmatprep.subr.mxu0 0.0
        %1146 = vmatpush2.msra.mxu0 0.0
        %1147 = vmatprep.subr.mxu0 0.0
        %1148 = vmatpush2.msra.mxu0 0.0
        %1149 = vmatprep.mubr.f32.mxu0 0.0
        %1150 = vmatmul.mubr.f32.gmra.mxu0 %v1062
        %v1151 = vpop.f32.mrf.mxu0
        %v1152 = vadd.f32 0.0, %v1151
        %v1153 = vpop.f32.mrf.mxu0
        %1154 = vmatprep.mubr.f32.mxu0 0.0
        %1155 = vmatmul.mubr.f32.gmra.mxu0 %v1065
        %v1156 = vpop.f32.mrf.mxu0
        %v1157 = vadd.f32 0.0, %v1156
        %v1158 = vpop.f32.mrf.mxu0
        %1159 = vmatprep.mubr.f32.mxu0 0.0
        %1160 = vmatmul.mubr.f32.gmra.mxu0 %v1068
        %v1161 = vpop.f32.mrf.mxu0
        %v1162 = vadd.f32 0.0, %v1161
        %v1163 = vpop.f32.mrf.mxu0
        %1164 = vmatprep.mubr.f32.mxu0 0.0
        %1165 = vmatmul.mubr.f32.gmra.mxu0 %v1071
        %v1166 = vpop.f32.mrf.mxu0
        %v1167 = vadd.f32 0.0, %v1166
        %v1168 = vpop.f32.mrf.mxu0
        %1169 = vmatprep.mubr.f32.mxu0 0.0
        %1170 = vmatmul.mubr.f32.gmra.mxu0 %v1074
        %v1171 = vpop.f32.mrf.mxu0
        %v1172 = vadd.f32 0.0, %v1171
        %v1173 = vpop.f32.mrf.mxu0
        %1174 = vmatprep.mubr.f32.mxu0 0.0
        %1175 = vmatmul.mubr.f32.gmra.mxu0 %v1077
        %v1176 = vpop.f32.mrf.mxu0
        %v1177 = vadd.f32 0.0, %v1176
        %v1178 = vpop.f32.mrf.mxu0
        %1179 = vmatprep.mubr.f32.mxu0 0.0
        %1180 = vmatmul.mubr.f32.gmra.mxu0 %v1080
        %v1181 = vpop.f32.mrf.mxu0
        %v1182 = vadd.f32 0.0, %v1181
        %v1183 = vpop.f32.mrf.mxu0
        %1184 = vmatprep.mubr.f32.mxu0 0.0
        %1185 = vmatmul.mubr.f32.gmra.mxu0 %v1083
        %v1186 = vpop.f32.mrf.mxu0
        %v1187 = vadd.f32 0.0, %v1186
        %v1188 = vpop.f32.mrf.mxu0
        %1189 = vdwg.mxu0
        %s1190 = scalar_lea.vmem [#allocation8], 64
        %v1191 = vld [vmem:[%s1190] sm:$0xff]
        %v1192 = vld [vmem:[%s1190 + $0x8] sm:$0xff]
        %v1193 = vld [vmem:[%s1190 + $0x10] sm:$0xff]
        %v1194 = vld [vmem:[%s1190 + $0x18] sm:$0xff]
        %v1196 = vsel %vm926, %v914, 0
        %v1199 = vsel %vm926, %v915, 0
        %v1202 = vsel %vm926, %v916, 0
        %v1205 = vsel %vm926, %v917, 0
        %v1208 = vsel %vm926, %v918, 0
        %v1211 = vsel %vm926, %v919, 0
        %v1214 = vsel %vm926, %v920, 0
        %v1217 = vsel %vm926, %v921, 0
        %1219 = vmatprep.subr.mxu0 0.0
        %1220 = vmatpush1.msra.mxu0 0.0
        %1221 = vmatprep.subr.mxu0 0.0
        %1222 = vmatpush1.msra.mxu0 0.0
        %1223 = vmatprep.subr.mxu0 0.0
        %1224 = vmatpush1.msra.mxu0 0.0
        %1225 = vmatprep.subr.mxu0 0.0
        %1226 = vmatpush1.msra.mxu0 0.0
        %1227 = vmatprep.subr.mxu0 0.0
        %1228 = vmatpush1.msra.mxu0 0.0
        %1229 = vmatprep.subr.mxu0 0.0
        %1230 = vmatpush1.msra.mxu0 0.0
        %1231 = vmatprep.subr.mxu0 0.0
        %1232 = vmatpush1.msra.mxu0 0.0
        %1233 = vmatprep.subr.mxu0 0.0
        %1234 = vmatpush1.msra.mxu0 0.0
        %1235 = vmatprep.subr.mxu0 0.0
        %1236 = vmatpush1.msra.mxu0 0.0
        %1237 = vmatprep.subr.mxu0 0.0
        %1238 = vmatpush1.msra.mxu0 0.0
        %1239 = vmatprep.subr.mxu0 0.0
        %1240 = vmatpush1.msra.mxu0 0.0
        %1241 = vmatprep.subr.mxu0 0.0
        %1242 = vmatpush1.msra.mxu0 0.0
        %1243 = vmatprep.subr.mxu0 0.0
        %1244 = vmatpush1.msra.mxu0 %v1194
        %1245 = vmatprep.subr.mxu0 0.0
        %1246 = vmatpush1.msra.mxu0 %v1193
        %1247 = vmatprep.subr.mxu0 0.0
        %1248 = vmatpush1.msra.mxu0 %v1192
        %1249 = vmatprep.subr.mxu0 0.0
        %1250 = vmatpush1.msra.mxu0 %v1191
        %1251 = vmatprep.subr.mxu0 0.0
        %1252 = vmatpush2.msra.mxu0 0.0
        %1253 = vmatprep.subr.mxu0 0.0
        %1254 = vmatpush2.msra.mxu0 0.0
        %1255 = vmatprep.subr.mxu0 0.0
        %1256 = vmatpush2.msra.mxu0 0.0
        %1257 = vmatprep.subr.mxu0 0.0
        %1258 = vmatpush2.msra.mxu0 0.0
        %1259 = vmatprep.subr.mxu0 0.0
        %1260 = vmatpush2.msra.mxu0 0.0
        %1261 = vmatprep.subr.mxu0 0.0
        %1262 = vmatpush2.msra.mxu0 0.0
        %1263 = vmatprep.subr.mxu0 0.0
        %1264 = vmatpush2.msra.mxu0 0.0
        %1265 = vmatprep.subr.mxu0 0.0
        %1266 = vmatpush2.msra.mxu0 0.0
        %1267 = vmatprep.subr.mxu0 0.0
        %1268 = vmatpush2.msra.mxu0 0.0
        %1269 = vmatprep.subr.mxu0 0.0
        %1270 = vmatpush2.msra.mxu0 0.0
        %1271 = vmatprep.subr.mxu0 0.0
        %1272 = vmatpush2.msra.mxu0 0.0
        %1273 = vmatprep.subr.mxu0 0.0
        %1274 = vmatpush2.msra.mxu0 0.0
        %1275 = vmatprep.subr.mxu0 0.0
        %1276 = vmatpush2.msra.mxu0 0.0
        %1277 = vmatprep.subr.mxu0 0.0
        %1278 = vmatpush2.msra.mxu0 0.0
        %1279 = vmatprep.subr.mxu0 0.0
        %1280 = vmatpush2.msra.mxu0 0.0
        %1281 = vmatprep.subr.mxu0 0.0
        %1282 = vmatpush2.msra.mxu0 0.0
        %1283 = vmatprep.mubr.f32.mxu0 0.0
        %1284 = vmatmul.mubr.f32.gmra.mxu0 %v1196
        %v1285 = vpop.f32.mrf.mxu0
        %v1286 = vadd.f32 0.0, %v1285
        %v1287 = vpop.f32.mrf.mxu0
        %1288 = vmatprep.mubr.f32.mxu0 0.0
        %1289 = vmatmul.mubr.f32.gmra.mxu0 %v1199
        %v1290 = vpop.f32.mrf.mxu0
        %v1291 = vadd.f32 0.0, %v1290
        %v1292 = vpop.f32.mrf.mxu0
        %1293 = vmatprep.mubr.f32.mxu0 0.0
        %1294 = vmatmul.mubr.f32.gmra.mxu0 %v1202
        %v1295 = vpop.f32.mrf.mxu0
        %v1296 = vadd.f32 0.0, %v1295
        %v1297 = vpop.f32.mrf.mxu0
        %1298 = vmatprep.mubr.f32.mxu0 0.0
        %1299 = vmatmul.mubr.f32.gmra.mxu0 %v1205
        %v1300 = vpop.f32.mrf.mxu0
        %v1301 = vadd.f32 0.0, %v1300
        %v1302 = vpop.f32.mrf.mxu0
        %1303 = vmatprep.mubr.f32.mxu0 0.0
        %1304 = vmatmul.mubr.f32.gmra.mxu0 %v1208
        %v1305 = vpop.f32.mrf.mxu0
        %v1306 = vadd.f32 0.0, %v1305
        %v1307 = vpop.f32.mrf.mxu0
        %1308 = vmatprep.mubr.f32.mxu0 0.0
        %1309 = vmatmul.mubr.f32.gmra.mxu0 %v1211
        %v1310 = vpop.f32.mrf.mxu0
        %v1311 = vadd.f32 0.0, %v1310
        %v1312 = vpop.f32.mrf.mxu0
        %1313 = vmatprep.mubr.f32.mxu0 0.0
        %1314 = vmatmul.mubr.f32.gmra.mxu0 %v1214
        %v1315 = vpop.f32.mrf.mxu0
        %v1316 = vadd.f32 0.0, %v1315
        %v1317 = vpop.f32.mrf.mxu0
        %1318 = vmatprep.mubr.f32.mxu0 0.0
        %1319 = vmatmul.mubr.f32.gmra.mxu0 %v1217
        %v1320 = vpop.f32.mrf.mxu0
        %v1321 = vadd.f32 0.0, %v1320
        %v1322 = vpop.f32.mrf.mxu0
        %1323 = vdwg.mxu0
        %1332 = vrot.lane.b32.xlu0 %v1152, 32
        %v1333 = vpop.permute.xlu0 %1332
        %1334 = vrot.lane.b32.xlu0 %v1157, 32
        %v1335 = vpop.permute.xlu0 %1334
        %1336 = vrot.lane.b32.xlu0 %v1162, 32
        %v1337 = vpop.permute.xlu0 %1336
        %1338 = vrot.lane.b32.xlu0 %v1167, 32
        %v1339 = vpop.permute.xlu0 %1338
        %1340 = vrot.lane.b32.xlu0 %v1172, 32
        %v1341 = vpop.permute.xlu0 %1340
        %1342 = vrot.lane.b32.xlu0 %v1177, 32
        %v1343 = vpop.permute.xlu0 %1342
        %1344 = vrot.lane.b32.xlu0 %v1182, 32
        %v1345 = vpop.permute.xlu0 %1344
        %1346 = vrot.lane.b32.xlu0 %v1187, 32
        %v1347 = vpop.permute.xlu0 %1346
        %1364 = vrot.lane.b32.xlu0 %v1286, 64
        %v1365 = vpop.permute.xlu0 %1364
        %1366 = vrot.lane.b32.xlu0 %v1291, 64
        %v1367 = vpop.permute.xlu0 %1366
        %1368 = vrot.lane.b32.xlu0 %v1296, 64
        %v1369 = vpop.permute.xlu0 %1368
        %1370 = vrot.lane.b32.xlu0 %v1301, 64
        %v1371 = vpop.permute.xlu0 %1370
        %1372 = vrot.lane.b32.xlu0 %v1306, 64
        %v1373 = vpop.permute.xlu0 %1372
        %1374 = vrot.lane.b32.xlu0 %v1311, 64
        %v1375 = vpop.permute.xlu0 %1374
        %1376 = vrot.lane.b32.xlu0 %v1316, 64
        %v1377 = vpop.permute.xlu0 %1376
        %1378 = vrot.lane.b32.xlu0 %v1321, 64
        %v1379 = vpop.permute.xlu0 %1378
        %v1388 = vsel %vm926, %v1018, %v1333
        %v1389 = vsel %vm926, %v1023, %v1335
        %v1390 = vsel %vm926, %v1028, %v1337
        %v1391 = vsel %vm926, %v1033, %v1339
        %v1392 = vsel %vm926, %v1038, %v1341
        %v1393 = vsel %vm926, %v1043, %v1343
        %v1394 = vsel %vm926, %v1048, %v1345
        %v1395 = vsel %vm926, %v1053, %v1347
        %vm1396 = vcmask 523264
        %v1397 = vsel %vm1396, %v1388, %v1365
        %v1398 = vsel %vm1396, %v1389, %v1367
        %v1399 = vsel %vm1396, %v1390, %v1369
        %v1400 = vsel %vm1396, %v1391, %v1371
        %v1401 = vsel %vm1396, %v1392, %v1373
        %v1402 = vsel %vm1396, %v1393, %v1375
        %v1403 = vsel %vm1396, %v1394, %v1377
        %v1404 = vsel %vm1396, %v1395, %v1379
        %v1406 = vlaneseq
        %v1407 = vshrl.u32 %v1406, 7
        %v1408 = vsub.s32 0, %v1407
        %v1409 = vrot.slane %v295, %v1408
        %v1411 = vadd.f32 %v1397, %v1409
        %v1412 = vadd.f32 %v1398, %v1409
        %v1413 = vadd.f32 %v1399, %v1409
        %v1414 = vadd.f32 %v1400, %v1409
        %v1415 = vadd.f32 %v1401, %v1409
        %v1416 = vadd.f32 %v1402, %v1409
        %v1417 = vadd.f32 %v1403, %v1409
        %v1418 = vadd.f32 %v1404, %v1409
        %vm1419 = vcmask 785408
        %1420 = vst.msk [vmem:[%s284] sm:$0xff] %vm1419, %v1411
        %1421 = vst.msk [vmem:[%s284 + $0x8] sm:$0xff] %vm1419, %v1412
        %1422 = vst.msk [vmem:[%s284 + $0x10] sm:$0xff] %vm1419, %v1413
        %1423 = vst.msk [vmem:[%s284 + $0x18] sm:$0xff] %vm1419, %v1414
        %1424 = vst.msk [vmem:[%s284 + $0x20] sm:$0xff] %vm1419, %v1415
        %1425 = vst.msk [vmem:[%s284 + $0x28] sm:$0xff] %vm1419, %v1416
        %1426 = vst.msk [vmem:[%s284 + $0x30] sm:$0xff] %vm1419, %v1417
        %1427 = vst.msk [vmem:[%s284 + $0x38] sm:$0xff] %vm1419, %v1418
        %s1428 = sand.u32 %s142, 1
        %s1429 = scalar_lea.sflag [#allocation4], %s1428
        %s1430 = sand.u32 %s142, 1
        %s1431 = smul.addr %s1430, 64
        %s1432 = scalar_lea.vmem [#allocation10], %s1431
        // Predicated region
        $region57: #{tpu_custom_call.1} parent=39 // pred_check
          %p1433 = pneg %p152
        $region58: #{tpu_custom_call.1} parent=39 // pred_check_branch
          %1435 = sbr.rel (%p1433) target = $region60
        $region59: #{tpu_custom_call.1} parent=39 // pred_region
          %s1437 = ssub.s32 1024, 1024
          %1438 = vsyncadd %s1429, %s1437
          %s1439 = smul.addr %s24, 8
          %s1440 = smul.addr %s1439, 128
          %s1441 = scalar_lea.hbm %s5, %s1440
          %s1442 = sshll.u32 %s1432, 4
          %s1443 = int_to_ptr.vmem [resolvable:$true] %s1442
          %1448 = dma.vmem_to_hbm [thread:$0]  %s1443, 1024, %s1441, %s1429, 128, 128, 8
        $region60: #{tpu_custom_call.1} parent=39 // pred_fallthru
          _
      $region40: #{tpu_custom_call.1} parent=5 // pred_fallthru
        _
      %p1449 = scmp.le.s32.totalorder 2, %s19
      // Predicated region
      $region61: #{tpu_custom_call.1} parent=5 // pred_check
        %p1450 = pneg %p1449
      $region62: #{tpu_custom_call.1} parent=5 // pred_check_branch
        %1452 = sbr.rel (%p1450) target = $region64
      $region63: #{tpu_custom_call.1} parent=5 // pred_region
        %s1453 = ssub.s32 %s19, 2
        // Predicated region
        $region65: #{tpu_custom_call.1} parent=63 // pred_check
          %p1454 = pneg %p158
        $region66: #{tpu_custom_call.1} parent=63 // pred_check_branch
          %1456 = sbr.rel (%p1454) target = $region68
        $region67: #{tpu_custom_call.1} parent=63 // pred_region
          %s1457 = sand.u32 %s143, 1
          %s1458 = scalar_lea.sflag [#allocation4], %s1457
          %s1459 = sand.u32 %s143, 1
          %s1460 = smul.addr %s1459, 64
          %s1461 = scalar_lea.vmem [#allocation10], %s1460
          %1462 = dma.done %s1458, 1024
        $region68: #{tpu_custom_call.1} parent=63 // pred_fallthru
          _
      $region64: #{tpu_custom_call.1} parent=5 // pred_fallthru
        _
    $region6: #{tpu_custom_call.1} parent=1 // loop_footer
      %s23 = sadd.s32 1, %s19
    $region7: #{tpu_custom_call.1} parent=1 // loop_footer_branch
      %18 = sbr.rel target = $region3
    $region8: #{tpu_custom_call.1} parent=1 // loop_exit
      _
    %1463 = vsyncpa [#allocation3], 1
    %s1464 = scalar_lea.sflag [#allocation3], 1
    %1465 = vsyncpa %s1464, 1
    %1466 = vsyncpa [#allocation6], 1
    %1467 = vsyncpa [#allocation9], 1
    %1468 = vsyncpa [#allocation4], 1
    %s1469 = scalar_lea.sflag [#allocation4], 1
    %1470 = vsyncpa %s1469, 1

</llo_original>
